<compile_context>
chip_gen: v6e
topology: v6e:2x2x1
jax: 0.10.0
libtpu: 0.0.40
codegen_flags: <defaults>
</compile_context>

<pallas_src>
import functools

import jax
import jax.numpy as jnp
from jax.experimental import pallas as pl
from jax.experimental.pallas import tpu as pltpu

BN_EPS = 1e-5


# ----------------------------------------------------------------------------
# Fused Pallas kernel: whole batch in one step, everything resident in VMEM
# ----------------------------------------------------------------------------
def _fused_kernel(x_ref, w_qkv_ref, b_qkv_ref, w_out_ref, b_out_ref, o_ref,
                  *, h, w):
    """Q/K/V proj + spatial attention + out proj + residual, fully in VMEM.

    x_ref    : VMEM (B*C, H*W)      input, sublane/lane dense.
    w_qkv_ref: VMEM (3*B*C, B*C)    BN-folded q/k/v weights, batch-block-diag,
                                    rows ordered [q | k | v].
    b_qkv_ref: VMEM (3*B*C, 1)      matching folded biases.
    w_out_ref: VMEM (B*C, B*C)      BN-folded out-proj weights, block-diag.
    b_out_ref: VMEM (B*C, 1)        folded out-proj bias.
    o_ref    : VMEM (B*C, H*W)      output, lane-dense store.
    """
    n, hw = x_ref.shape                       # n = B*C, hw = H*W
    x = x_ref[...]                            # (8, 256) dense load

    # --- Q/K/V projections (eval-mode BN folded): one fused MXU apply. ---
    qkv = jnp.dot(w_qkv_ref[...], x, preferred_element_type=jnp.float32)
    qkv = qkv + b_qkv_ref[...]                # (3*B*C, HW)

    # Relayout #1: flat -> spatial, only for the attention matmuls.
    q = qkv[0 * n:1 * n].reshape(n, h, w)
    k = qkv[1 * n:2 * n].reshape(n, h, w)
    v = qkv[2 * n:3 * n].reshape(n, h, w)

    # Per-(batch, channel) spatial attention, batched over all B*C at once.
    scale = 1.0 / jnp.sqrt(jnp.float32(w))    # sqrt(q.shape[-1]) as in torch
    s = jnp.einsum("nhw,nxw->nhx", q, k,
                   preferred_element_type=jnp.float32) * scale
    s = s - jnp.max(s, axis=-1, keepdims=True)
    p = jnp.exp(s)
    p = p / jnp.sum(p, axis=-1, keepdims=True)        # exact normalizer
    attn = jnp.einsum("nhx,nxw->nhw", p, v,
                      preferred_element_type=jnp.float32)

    # Relayout #2: spatial -> flat; out-proj, bias, residual, store lane-dense.
    attn_flat = attn.reshape(n, hw)
    out = jnp.dot(w_out_ref[...], attn_flat, preferred_element_type=jnp.float32)
    o_ref[...] = out + b_out_ref[...] + x     # residual (C_in == C_out)


# ----------------------------------------------------------------------------
# Parameter setup & module forward
# ----------------------------------------------------------------------------
def _fold_bn(conv_w, conv_b, gamma, beta, mean, var):
    """Fold eval-mode BatchNorm into a 1x1 conv: y[o] = sum_c W_eff[o,c] x[c] + b_eff[o]."""
    scale = gamma / jnp.sqrt(var + BN_EPS)             # (C_out,)
    w_eff = conv_w * scale[:, None]                    # (C_out, C_in)
    b_eff = scale * (conv_b - mean) + beta             # (C_out,)
    return w_eff.astype(jnp.float32), b_eff.astype(jnp.float32)


def init_params(key, in_channels, out_channels):
    ks = jax.random.split(key, 16)
    p = {}
    names = ["q", "k", "v", "out"]
    cins = [in_channels, in_channels, in_channels, out_channels]
    for i, (name, cin) in enumerate(zip(names, cins)):
        k0, k1, k2, k3 = jax.random.split(ks[i], 4)
        p[f"conv_{name}_w"] = 0.1 * jax.random.normal(
            k0, (out_channels, cin), jnp.float32)
        p[f"conv_{name}_b"] = 0.1 * jax.random.normal(
            k1, (out_channels,), jnp.float32)
        p[f"bn_{name}_gamma"] = 1.0 + 0.1 * jax.random.normal(
            k2, (out_channels,), jnp.float32)
        p[f"bn_{name}_beta"] = 0.1 * jax.random.normal(
            k3, (out_channels,), jnp.float32)
        p[f"bn_{name}_mean"] = 0.05 * jax.random.normal(
            ks[4 + i], (out_channels,), jnp.float32)
        p[f"bn_{name}_var"] = 0.5 + jax.random.uniform(
            ks[8 + i], (out_channels,), jnp.float32)
    return p


@jax.jit
def self_attention_block(x, params):
    """x: (B, C_in, H, W) NCHW float32 -> (B, C_out, H, W)."""
    b, c_in, h, w = x.shape
    c_out = params["conv_q_w"].shape[0]
    assert c_in == c_out, "residual add requires in_channels == out_channels"
    c = c_out
    hw = h * w
    n = b * c

    # Fold BN into the four 1x1 convs.
    folded = {
        name: _fold_bn(
            params[f"conv_{name}_w"], params[f"conv_{name}_b"],
            params[f"bn_{name}_gamma"], params[f"bn_{name}_beta"],
            params[f"bn_{name}_mean"], params[f"bn_{name}_var"])
        for name in ("q", "k", "v", "out")
    }

    # Batch-block-diagonal packing so the in-kernel channel mixes are single
    # dense matmuls on the sublane-packed (B*C, HW) layout.  Rows within the
    # q/k/v block (and within out) are ordered row = b_idx*C + channel,
    # matching x.reshape(B*C, HW).
    eye_b = jnp.eye(b, dtype=jnp.float32)
    w_qkv_bd = jnp.concatenate(
        [jnp.kron(eye_b, folded[name][0]) for name in ("q", "k", "v")],
        axis=0)                                             # (3*B*C, B*C)
    b_qkv_bd = jnp.concatenate(
        [jnp.tile(folded[name][1], b) for name in ("q", "k", "v")])[:, None]
    w_out_bd = jnp.kron(eye_b, folded["out"][0])            # (B*C, B*C)
    b_out_bd = jnp.tile(folded["out"][1], b)[:, None]       # (B*C, 1)

    # (B, C, H, W) -> (B*C, H*W): contiguous reshape (no transpose); gives the
    # kernel fully (8,128)-dense vregs for its loads, residual add and store.
    x_flat = x.reshape(n, hw)

    out_flat = pl.pallas_call(
        functools.partial(_fused_kernel, h=h, w=w),
        out_shape=jax.ShapeDtypeStruct((n, hw), jnp.float32),
        in_specs=[
            pl.BlockSpec(memory_space=pltpu.MemorySpace.VMEM),  # x (B*C, HW)
            pl.BlockSpec(memory_space=pltpu.MemorySpace.VMEM),  # w_qkv_bd
            pl.BlockSpec(memory_space=pltpu.MemorySpace.VMEM),  # b_qkv_bd
            pl.BlockSpec(memory_space=pltpu.MemorySpace.VMEM),  # w_out_bd
            pl.BlockSpec(memory_space=pltpu.MemorySpace.VMEM),  # b_out_bd
        ],
        out_specs=pl.BlockSpec(memory_space=pltpu.MemorySpace.VMEM),
    )(x_flat, w_qkv_bd, b_qkv_bd, w_out_bd, b_out_bd)

    return out_flat.reshape(b, c, h, w)


# ----------------------------------------------------------------------------
# Pure-JAX reference (for correctness check)
# ----------------------------------------------------------------------------
def reference(x, params):
    def conv_bn(t, name):
        wt = params[f"conv_{name}_w"]
        bias = params[f"conv_{name}_b"]
        y = jnp.einsum("bchw,oc->bohw", t, wt) + bias[None, :, None, None]
        g = params[f"bn_{name}_gamma"][None, :, None, None]
        be = params[f"bn_{name}_beta"][None, :, None, None]
        m = params[f"bn_{name}_mean"][None, :, None, None]
        v = params[f"bn_{name}_var"][None, :, None, None]
        return g * (y - m) / jnp.sqrt(v + BN_EPS) + be

    q = conv_bn(x, "q")
    k = conv_bn(x, "k")
    v = conv_bn(x, "v")
    scale = 1.0 / jnp.sqrt(jnp.float32(q.shape[-1]))
    s = jnp.einsum("bchw,bcxw->bchx", q, k) * scale
    a = jax.nn.softmax(s, axis=-1)
    o = jnp.einsum("bchx,bcxw->bchw", a, v)
    out = conv_bn(o, "out")
    return out + x


# ----------------------------------------------------------------------------
if __name__ == "__main__":
    key = jax.random.PRNGKey(0)
    k_x, k_p = jax.random.split(key)

    B, C, H, W = 2, 4, 16, 16          # in_channels == out_channels == 4
    x = jax.random.normal(k_x, (B, C, H, W), jnp.float32)
    params = init_params(k_p, C, C)

    out = jax.block_until_ready(self_attention_block(x, params))
    ref = reference(x, params)

    assert out.shape == (B, C, H, W)
    max_diff = jnp.max(jnp.abs(out - ref))
    # Exact softmax normalizer (plain division) — expected well inside 1e-3.
    assert jnp.allclose(out, ref, atol=1e-3, rtol=1e-3), (
        f"max abs diff {max_diff}")

    print("KERNEL_OK")
</pallas_src>

<mosaic_0001>
module attributes {stable_mosaic.version = 11 : i64} {
  func.func @_fused_kernel(%arg0: memref<8x256xf32, #tpu.memory_space<vmem>>, %arg1: memref<24x8xf32, #tpu.memory_space<vmem>>, %arg2: memref<24x1xf32, #tpu.memory_space<vmem>>, %arg3: memref<8x8xf32, #tpu.memory_space<vmem>>, %arg4: memref<8x1xf32, #tpu.memory_space<vmem>>, %arg5: memref<8x256xf32, #tpu.memory_space<vmem>>) attributes {dimension_semantics = [], scalar_prefetch = 0 : i64, scratch_operands = 0 : i64, tpu.core_type = #tpu.core_type<tc>} {
    %c0 = arith.constant 0 : index
    %c0_0 = arith.constant 0 : index
    %0 = vector.load %arg0[%c0, %c0_0] : memref<8x256xf32, #tpu.memory_space<vmem>>, vector<8x256xf32>
    %c0_1 = arith.constant 0 : index
    %c0_2 = arith.constant 0 : index
    %1 = vector.load %arg1[%c0_1, %c0_2] : memref<24x8xf32, #tpu.memory_space<vmem>>, vector<24x8xf32>
    %cst = arith.constant dense<0.000000e+00> : vector<24x256xf32>
    %2 = tpu.matmul %1, %0, %cst {dimension_numbers = #tpu.dot_dimension_numbers<[1], [0], [0], [1], [0, 0, 1, 1], [], []>} : vector<24x8xf32>, vector<8x256xf32>, vector<24x256xf32> -> vector<24x256xf32>
    %c0_3 = arith.constant 0 : index
    %c0_4 = arith.constant 0 : index
    %3 = vector.load %arg2[%c0_3, %c0_4] : memref<24x1xf32, #tpu.memory_space<vmem>>, vector<24x1xf32>
    %4 = vector.broadcast %3 : vector<24x1xf32> to vector<24x256xf32>
    %5 = arith.addf %2, %4 : vector<24x256xf32>
    %6 = vector.extract_strided_slice %5 {offsets = [0, 0], sizes = [8, 256], strides = [1, 1]} : vector<24x256xf32> to vector<8x256xf32>
    %7 = vector.shape_cast %6 : vector<8x256xf32> to vector<8x16x16xf32>
    %8 = vector.extract_strided_slice %5 {offsets = [8, 0], sizes = [8, 256], strides = [1, 1]} : vector<24x256xf32> to vector<8x256xf32>
    %9 = vector.shape_cast %8 : vector<8x256xf32> to vector<8x16x16xf32>
    %10 = vector.extract_strided_slice %5 {offsets = [16, 0], sizes = [8, 256], strides = [1, 1]} : vector<24x256xf32> to vector<8x256xf32>
    %11 = vector.shape_cast %10 : vector<8x256xf32> to vector<8x16x16xf32>
    %cst_5 = arith.constant 1.600000e+01 : f32
    %12 = math.sqrt %cst_5 : f32
    %cst_6 = arith.constant 1.000000e+00 : f32
    %13 = arith.divf %cst_6, %12 : f32
    "tpu.trace_start"() <{level = 10 : i32, message = "nhw,nxw->nhx"}> : () -> ()
    %cst_7 = arith.constant dense<0.000000e+00> : vector<8x16x16xf32>
    %14 = tpu.matmul %7, %9, %cst_7 {dimension_numbers = #tpu.dot_dimension_numbers<[2], [2], [1], [1], [0, 0, 0, 1, 1, 1], [0], [0]>} : vector<8x16x16xf32>, vector<8x16x16xf32>, vector<8x16x16xf32> -> vector<8x16x16xf32>
    "tpu.trace_stop"() : () -> ()
    %15 = vector.broadcast %13 : f32 to vector<8x16x16xf32>
    %16 = arith.mulf %14, %15 : vector<8x16x16xf32>
    %cst_8 = arith.constant dense<0xFF800000> : vector<8x16xf32>
    %17 = vector.multi_reduction <maximumf>, %16, %cst_8 [2] : vector<8x16x16xf32> to vector<8x16xf32>
    %18 = vector.shape_cast %17 : vector<8x16xf32> to vector<8x16x1xf32>
    %19 = vector.broadcast %18 : vector<8x16x1xf32> to vector<8x16x16xf32>
    %20 = arith.subf %16, %19 : vector<8x16x16xf32>
    %21 = math.exp %20 : vector<8x16x16xf32>
    %cst_9 = arith.constant dense<0.000000e+00> : vector<8x16xf32>
    %22 = vector.multi_reduction <add>, %21, %cst_9 [2] : vector<8x16x16xf32> to vector<8x16xf32>
    %23 = vector.shape_cast %22 : vector<8x16xf32> to vector<8x16x1xf32>
    %24 = vector.broadcast %23 : vector<8x16x1xf32> to vector<8x16x16xf32>
    %25 = arith.divf %21, %24 : vector<8x16x16xf32>
    "tpu.trace_start"() <{level = 10 : i32, message = "nhx,nxw->nhw"}> : () -> ()
    %cst_10 = arith.constant dense<0.000000e+00> : vector<8x16x16xf32>
    %26 = tpu.matmul %25, %11, %cst_10 {dimension_numbers = #tpu.dot_dimension_numbers<[2], [1], [1], [2], [0, 0, 0, 1, 1, 2], [0], [0]>} : vector<8x16x16xf32>, vector<8x16x16xf32>, vector<8x16x16xf32> -> vector<8x16x16xf32>
    "tpu.trace_stop"() : () -> ()
    %27 = vector.shape_cast %26 : vector<8x16x16xf32> to vector<8x256xf32>
    %c0_11 = arith.constant 0 : index
    %c0_12 = arith.constant 0 : index
    %28 = vector.load %arg3[%c0_11, %c0_12] : memref<8x8xf32, #tpu.memory_space<vmem>>, vector<8x8xf32>
    %cst_13 = arith.constant dense<0.000000e+00> : vector<8x256xf32>
    %29 = tpu.matmul %28, %27, %cst_13 {dimension_numbers = #tpu.dot_dimension_numbers<[1], [0], [0], [1], [0, 0, 1, 1], [], []>} : vector<8x8xf32>, vector<8x256xf32>, vector<8x256xf32> -> vector<8x256xf32>
    %c0_14 = arith.constant 0 : index
    %c0_15 = arith.constant 0 : index
    %30 = vector.load %arg4[%c0_14, %c0_15] : memref<8x1xf32, #tpu.memory_space<vmem>>, vector<8x1xf32>
    %31 = vector.broadcast %30 : vector<8x1xf32> to vector<8x256xf32>
    %32 = arith.addf %29, %31 : vector<8x256xf32>
    %33 = arith.addf %32, %0 : vector<8x256xf32>
    %c0_16 = arith.constant 0 : index
    %c0_17 = arith.constant 0 : index
    %34 = vector.load %arg5[%c0_16, %c0_17] : memref<8x256xf32, #tpu.memory_space<vmem>>, vector<8x256xf32>
    tpu.vector_store %arg5[%c0_16, %c0_17], %33 {strides = array<i32>} : memref<8x256xf32, #tpu.memory_space<vmem>>, vector<8x256xf32>,
    return
  }
}

</mosaic_0001>

<llo_original>
// kernel: tile.28
$region0: #{tile.28}
  #allocation0 [shape = 's32[1]{0}', space=sflag, size = 0x4, scoped, tag = 'scoped memory for tile.28']
  %s0 = inlined_call_operand.vmem [shape: f32[4], index: 0, kind: input, shape index: {}]
  %s1 = inlined_call_operand.vmem [shape: f32[2,4], index: 1, kind: output, shape index: {}]
  // Predicated region
  $region2: #{tile.28} parent=0 // pred_check
    _
  $region3: #{tile.28} parent=0 // pred_check_branch
    %3 = sbr.rel (0) target = $region5
  $region4: #{tile.28} parent=0 // pred_region
    _
  $region5: #{tile.28} parent=0 // pred_fallthru
    _
  %v4 = vld [vmem:[%s0] ss:$0 sm:$0xff]
  %5 = vst [vmem:[%s1] sm:$0x3] %v4

// kernel: tile.29
$region0: #{tile.29}
  %s0 = inlined_call_operand.vmem [shape: f32[2,4], index: 0, kind: input, shape index: {}]
  %s1 = inlined_call_operand.vmem [shape: f32[8], index: 1, kind: output, shape index: {}]
  $region1: #{tile.29} parent=0
    #allocation0 [shape = 'u8[4096]{0}', space=vmem, size = 0x1000, scoped, tag = 'scoped mem for output reshape']
    #allocation1 [shape = 'u8[4096]{0}', space=vmem, size = 0x1000, scoped, tag = 'scoped mem for input reshape']
    %s3 = sshll.u32 1, 2
    %s4 = ssub.s32 %s3, 1
    %v5 = vld [vmem:[%s0] sm:%s4]
    %6 = vst [vmem:[#allocation1] sm:%s4] %v5
    %v7 = vld [vmem:[#allocation1] sm:$0x1]
    %vm8 = vcmask 31744
    %9 = vst.msk [vmem:[#allocation0] sm:$0x1] %vm8, %v7
    %s10 = scalar_lea.vmem [#allocation1], 1
    %v11 = vld [vmem:[%s10] sm:$0x1]
    %12 = vrot.lane.b32.xlu0 %v11, 4
    %v13 = vpop.permute.xlu0 %12
    %vm14 = vcmask 64544
    %15 = vst.msk [vmem:[#allocation0] sm:$0x1] %vm14, %v13
    %s17 = sshll.u32 1, 1
    %s18 = ssub.s32 %s17, 1
    %v20 = vld [vmem:[#allocation0] sm:%s18]
    %s21 = sshll.u32 1, 1
    %s22 = ssub.s32 %s21, 1
    %23 = vst [vmem:[%s1] sm:%s22] %v20

// kernel: tile.0
$region0: #{tile.0}
  %s0 = inlined_call_operand.vmem [shape: f32[2,4], index: 0, kind: input, shape index: {}]
  %s1 = inlined_call_operand.vmem [shape: f32[8,1], index: 1, kind: output, shape index: {}]
  $region1: #{tile.0} parent=0
    #allocation0 [shape = 'u8[4096]{0}', space=vmem, size = 0x1000, scoped, tag = 'scoped mem for input reshape']
    %s3 = sshll.u32 1, 2
    %s4 = ssub.s32 %s3, 1
    %v5 = vld [vmem:[%s0] sm:%s4]
    %6 = vst [vmem:[#allocation0] sm:%s4] %v5
    %v7 = vld [vmem:[#allocation0] sm:$0x3]
    %vm8 = vcmask 7168
    %9 = vst.msk [vmem:[%s1] ss:$4 sm:$0x3] %vm8, %v7
    %v10 = vld [vmem:[#allocation0] sm:$0x3]
    %11 = vrot.lane.b32.xlu0 %v10, 127
    %v12 = vpop.permute.xlu0 %11
    %vm13 = vcmask 7168
    %s14 = scalar_lea.vmem %s1, 1
    %15 = vst.msk [vmem:[%s14] ss:$4 sm:$0x3] %vm13, %v12
    %v16 = vld [vmem:[#allocation0] sm:$0x3]
    %17 = vrot.lane.b32.xlu0 %v16, 126
    %v18 = vpop.permute.xlu0 %17
    %vm19 = vcmask 7168
    %s20 = scalar_lea.vmem %s1, 2
    %21 = vst.msk [vmem:[%s20] ss:$4 sm:$0x3] %vm19, %v18
    %v22 = vld [vmem:[#allocation0] sm:$0x3]
    %23 = vrot.lane.b32.xlu0 %v22, 125
    %v24 = vpop.permute.xlu0 %23
    %vm25 = vcmask 7168
    %s26 = scalar_lea.vmem %s1, 3
    %27 = vst.msk [vmem:[%s26] ss:$4 sm:$0x3] %vm25, %v24

// kernel: self_attention_block.1
$region0: #{self_attention_block.1}
  #allocation0 [shape = 'u32[]', space=smem, size = 0x4, offset = 0x4, fixed_abs, tag = 'smem constant byte address 0x4 - core index']
  #allocation1 [shape = 'u32[144,128]{1,0:T(1,128)}', space=vmem, size = 0x12000, scoped, tag = 'internal scratch']
  %s0 = inlined_call_operand.vmem [shape: f32[8,256], index: 0, kind: input, shape index: {}]
  %s1 = inlined_call_operand.vmem [shape: f32[24,8], index: 1, kind: input, shape index: {}]
  %s2 = inlined_call_operand.vmem [shape: f32[24,1], index: 2, kind: input, shape index: {}]
  %s3 = inlined_call_operand.vmem [shape: f32[8,8], index: 3, kind: input, shape index: {}]
  %s4 = inlined_call_operand.vmem [shape: f32[8,1], index: 4, kind: input, shape index: {}]
  %s5 = inlined_call_operand.vmem [shape: f32[8,256], index: 5, kind: output, shape index: {}]
  %s6 = sld [smem:[#allocation0]]
  $region30: #{self_attention_block.1} parent=0
    _
  %s8 = ssub.s32 1, %s6
  %s9 = scalar_select 0, %s8, %s6
  // Predicated region
  $region2: #{self_attention_block.1} parent=0 // pred_check
    _
  $region3: #{self_attention_block.1} parent=0 // pred_check_branch
    %11 = sbr.rel (0) target = $region5
  $region4: #{self_attention_block.1} parent=0 // pred_region
    _
  $region5: #{self_attention_block.1} parent=0 // pred_fallthru
    _
  // Predicated region
  $region6: #{self_attention_block.1} parent=0 // pred_check
    _
  $region7: #{self_attention_block.1} parent=0 // pred_check_branch
    %13 = sbr.rel (0) target = $region9
  $region8: #{self_attention_block.1} parent=0 // pred_region
    _
  $region9: #{self_attention_block.1} parent=0 // pred_fallthru
    _
  // Predicated region
  $region10: #{self_attention_block.1} parent=0 // pred_check
    _
  $region11: #{self_attention_block.1} parent=0 // pred_check_branch
    %15 = sbr.rel (0) target = $region13
  $region12: #{self_attention_block.1} parent=0 // pred_region
    _
  $region13: #{self_attention_block.1} parent=0 // pred_fallthru
    _
  // Predicated region
  $region14: #{self_attention_block.1} parent=0 // pred_check
    _
  $region15: #{self_attention_block.1} parent=0 // pred_check_branch
    %17 = sbr.rel (0) target = $region17
  $region16: #{self_attention_block.1} parent=0 // pred_region
    _
  $region17: #{self_attention_block.1} parent=0 // pred_fallthru
    _
  // Predicated region
  $region18: #{self_attention_block.1} parent=0 // pred_check
    _
  $region19: #{self_attention_block.1} parent=0 // pred_check_branch
    %19 = sbr.rel (0) target = $region21
  $region20: #{self_attention_block.1} parent=0 // pred_region
    _
  $region21: #{self_attention_block.1} parent=0 // pred_fallthru
    _
  %v20 = vld [vmem:[%s0] sm:$0xff]
  %v21 = vld [vmem:[%s0 + $0x8] sm:$0xff]
  %v22 = vld [vmem:[%s1] sm:$0xff]
  %v23 = vld [vmem:[%s1 + $0x8] sm:$0xff]
  %v24 = vld [vmem:[%s1 + $0x10] sm:$0xff]
  %v25 = vld [vmem:[%s2] sm:$0xff]
  %v26 = vld [vmem:[%s2 + $0x8] sm:$0xff]
  %v27 = vld [vmem:[%s2 + $0x10] sm:$0xff]
  %29 = vset.pattern.permute.xlu0 0
  %30 = vperm.xlu0 %29, %v25
  %v31 = vpop.permute.xlu0 %30
  %34 = vset.pattern.permute.xlu0 0
  %35 = vperm.xlu0 %34, %v26
  %v36 = vpop.permute.xlu0 %35
  %39 = vset.pattern.permute.xlu0 0
  %40 = vperm.xlu0 %39, %v27
  %v41 = vpop.permute.xlu0 %40
  %vm43 = vcmask 64512
  %v45 = vsel %vm43, %v22, 0
  %v48 = vsel %vm43, %v23, 0
  %v51 = vsel %vm43, %v24, 0
  %53 = vmatprep.subr.mxu0 0.0
  %54 = vmatpush1.msra.mxu0 0.0
  %55 = vmatprep.subr.mxu0 0.0
  %56 = vmatpush1.msra.mxu0 0.0
  %57 = vmatprep.subr.mxu0 0.0
  %58 = vmatpush1.msra.mxu0 0.0
  %59 = vmatprep.subr.mxu0 0.0
  %60 = vmatpush1.msra.mxu0 0.0
  %61 = vmatprep.subr.mxu0 0.0
  %62 = vmatpush1.msra.mxu0 0.0
  %63 = vmatprep.subr.mxu0 0.0
  %64 = vmatpush1.msra.mxu0 0.0
  %65 = vmatprep.subr.mxu0 0.0
  %66 = vmatpush1.msra.mxu0 0.0
  %67 = vmatprep.subr.mxu0 0.0
  %68 = vmatpush1.msra.mxu0 0.0
  %69 = vmatprep.subr.mxu0 0.0
  %70 = vmatpush1.msra.mxu0 0.0
  %71 = vmatprep.subr.mxu0 0.0
  %72 = vmatpush1.msra.mxu0 0.0
  %73 = vmatprep.subr.mxu0 0.0
  %74 = vmatpush1.msra.mxu0 0.0
  %75 = vmatprep.subr.mxu0 0.0
  %76 = vmatpush1.msra.mxu0 0.0
  %77 = vmatprep.subr.mxu0 0.0
  %78 = vmatpush1.msra.mxu0 0.0
  %79 = vmatprep.subr.mxu0 0.0
  %80 = vmatpush1.msra.mxu0 0.0
  %81 = vmatprep.subr.mxu0 0.0
  %82 = vmatpush1.msra.mxu0 0.0
  %83 = vmatprep.subr.mxu0 %v21
  %84 = vmatpush1.msra.mxu0 %v20
  %85 = vmatprep.subr.mxu0 0.0
  %86 = vmatpush2.msra.mxu0 0.0
  %87 = vmatprep.subr.mxu0 0.0
  %88 = vmatpush2.msra.mxu0 0.0
  %89 = vmatprep.subr.mxu0 0.0
  %90 = vmatpush2.msra.mxu0 0.0
  %91 = vmatprep.subr.mxu0 0.0
  %92 = vmatpush2.msra.mxu0 0.0
  %93 = vmatprep.subr.mxu0 0.0
  %94 = vmatpush2.msra.mxu0 0.0
  %95 = vmatprep.subr.mxu0 0.0
  %96 = vmatpush2.msra.mxu0 0.0
  %97 = vmatprep.subr.mxu0 0.0
  %98 = vmatpush2.msra.mxu0 0.0
  %99 = vmatprep.subr.mxu0 0.0
  %100 = vmatpush2.msra.mxu0 0.0
  %101 = vmatprep.subr.mxu0 0.0
  %102 = vmatpush2.msra.mxu0 0.0
  %103 = vmatprep.subr.mxu0 0.0
  %104 = vmatpush2.msra.mxu0 0.0
  %105 = vmatprep.subr.mxu0 0.0
  %106 = vmatpush2.msra.mxu0 0.0
  %107 = vmatprep.subr.mxu0 0.0
  %108 = vmatpush2.msra.mxu0 0.0
  %109 = vmatprep.subr.mxu0 0.0
  %110 = vmatpush2.msra.mxu0 0.0
  %111 = vmatprep.subr.mxu0 0.0
  %112 = vmatpush2.msra.mxu0 0.0
  %113 = vmatprep.subr.mxu0 0.0
  %114 = vmatpush2.msra.mxu0 0.0
  %115 = vmatprep.subr.mxu0 0.0
  %116 = vmatpush2.msra.mxu0 0.0
  %117 = vmatprep.mubr.f32.mxu0 0.0
  %118 = vmatmul.mubr.f32.gmra.mxu0 %v45
  %v119 = vpop.f32.mrf.mxu0
  %v120 = vadd.f32 %v31, %v119
  %v121 = vpop.f32.mrf.mxu0
  %v122 = vadd.f32 %v31, %v121
  %123 = vmatprep.mubr.f32.mxu0 0.0
  %124 = vmatmul.mubr.f32.gmra.mxu0 %v48
  %v125 = vpop.f32.mrf.mxu0
  %v126 = vadd.f32 %v36, %v125
  %v127 = vpop.f32.mrf.mxu0
  %v128 = vadd.f32 %v36, %v127
  %129 = vmatprep.mubr.f32.mxu0 0.0
  %130 = vmatmul.mubr.f32.gmra.mxu0 %v51
  %v131 = vpop.f32.mrf.mxu0
  %v132 = vadd.f32 %v41, %v131
  %v133 = vpop.f32.mrf.mxu0
  %v134 = vadd.f32 %v41, %v133
  %135 = vdwg.mxu0
  %137 = vrot.lane.b32.xlu0 %v120, 112
  %v138 = vpop.permute.xlu0 %137
  %140 = vrot.lane.b32.xlu0 %v120, 96
  %v141 = vpop.permute.xlu0 %140
  %143 = vrot.lane.b32.xlu0 %v120, 80
  %v144 = vpop.permute.xlu0 %143
  %146 = vrot.lane.b32.xlu0 %v120, 64
  %v147 = vpop.permute.xlu0 %146
  %149 = vrot.lane.b32.xlu0 %v120, 48
  %v150 = vpop.permute.xlu0 %149
  %152 = vrot.lane.b32.xlu0 %v120, 32
  %v153 = vpop.permute.xlu0 %152
  %155 = vrot.lane.b32.xlu0 %v120, 16
  %v156 = vpop.permute.xlu0 %155
  %159 = vrot.lane.b32.xlu0 %v122, 112
  %v160 = vpop.permute.xlu0 %159
  %162 = vrot.lane.b32.xlu0 %v122, 96
  %v163 = vpop.permute.xlu0 %162
  %165 = vrot.lane.b32.xlu0 %v122, 80
  %v166 = vpop.permute.xlu0 %165
  %168 = vrot.lane.b32.xlu0 %v122, 64
  %v169 = vpop.permute.xlu0 %168
  %171 = vrot.lane.b32.xlu0 %v122, 48
  %v172 = vpop.permute.xlu0 %171
  %174 = vrot.lane.b32.xlu0 %v122, 32
  %v175 = vpop.permute.xlu0 %174
  %177 = vrot.lane.b32.xlu0 %v122, 16
  %v178 = vpop.permute.xlu0 %177
  %v180 = vcombine.low %v120, %v141
  %v181 = vcombine.high %v120, %v141
  %v183 = vunpack.c.l.s4 1983009808
  %v184 = vunpack.c.0.s8 %v183
  %v185 = vlaneseq
  %v186 = vshrl.u32 %v185, 7
  %v187 = vsub.s32 %v184, %v186
  %v188 = vrot.slane %v180, %v187
  %v190 = vunpack.c.l.s4 1983009808
  %v191 = vunpack.c.0.s8 %v190
  %v192 = vlaneseq
  %v193 = vshrl.u32 %v192, 7
  %v194 = vsub.s32 %v191, %v193
  %v195 = vrot.slane %v181, %v194
  %v196 = vcombine.low %v138, %v144
  %v197 = vcombine.high %v138, %v144
  %v199 = vunpack.c.l.s4 1983009808
  %v200 = vunpack.c.0.s8 %v199
  %v201 = vlaneseq
  %v202 = vshrl.u32 %v201, 7
  %v203 = vsub.s32 %v200, %v202
  %v204 = vrot.slane %v196, %v203
  %v206 = vunpack.c.l.s4 1983009808
  %v207 = vunpack.c.0.s8 %v206
  %v208 = vlaneseq
  %v209 = vshrl.u32 %v208, 7
  %v210 = vsub.s32 %v207, %v209
  %v211 = vrot.slane %v197, %v210
  %v212 = vcombine.low %v147, %v153
  %v213 = vcombine.high %v147, %v153
  %v215 = vunpack.c.l.s4 1983009808
  %v216 = vunpack.c.0.s8 %v215
  %v217 = vlaneseq
  %v218 = vshrl.u32 %v217, 7
  %v219 = vsub.s32 %v216, %v218
  %v220 = vrot.slane %v212, %v219
  %v222 = vunpack.c.l.s4 1983009808
  %v223 = vunpack.c.0.s8 %v222
  %v224 = vlaneseq
  %v225 = vshrl.u32 %v224, 7
  %v226 = vsub.s32 %v223, %v225
  %v227 = vrot.slane %v213, %v226
  %v228 = vcombine.low %v150, %v156
  %v229 = vcombine.high %v150, %v156
  %v231 = vunpack.c.l.s4 1983009808
  %v232 = vunpack.c.0.s8 %v231
  %v233 = vlaneseq
  %v234 = vshrl.u32 %v233, 7
  %v235 = vsub.s32 %v232, %v234
  %v236 = vrot.slane %v228, %v235
  %v238 = vunpack.c.l.s4 1983009808
  %v239 = vunpack.c.0.s8 %v238
  %v240 = vlaneseq
  %v241 = vshrl.u32 %v240, 7
  %v242 = vsub.s32 %v239, %v241
  %v243 = vrot.slane %v229, %v242
  %v244 = vcombine.low %v188, %v204
  %v245 = vcombine.high %v188, %v204
  %v247 = vunpack.c.l.s4 1934713408
  %v248 = vunpack.c.0.s8 %v247
  %v249 = vlaneseq
  %v250 = vshrl.u32 %v249, 7
  %v251 = vsub.s32 %v248, %v250
  %v252 = vrot.slane %v244, %v251
  %v254 = vunpack.c.l.s4 1934713408
  %v255 = vunpack.c.0.s8 %v254
  %v256 = vlaneseq
  %v257 = vshrl.u32 %v256, 7
  %v258 = vsub.s32 %v255, %v257
  %v259 = vrot.slane %v245, %v258
  %v260 = vcombine.low %v195, %v211
  %v261 = vcombine.high %v195, %v211
  %v263 = vunpack.c.l.s4 1934713408
  %v264 = vunpack.c.0.s8 %v263
  %v265 = vlaneseq
  %v266 = vshrl.u32 %v265, 7
  %v267 = vsub.s32 %v264, %v266
  %v268 = vrot.slane %v260, %v267
  %v270 = vunpack.c.l.s4 1934713408
  %v271 = vunpack.c.0.s8 %v270
  %v272 = vlaneseq
  %v273 = vshrl.u32 %v272, 7
  %v274 = vsub.s32 %v271, %v273
  %v275 = vrot.slane %v261, %v274
  %v276 = vcombine.low %v220, %v236
  %v277 = vcombine.high %v220, %v236
  %v279 = vunpack.c.l.s4 1934713408
  %v280 = vunpack.c.0.s8 %v279
  %v281 = vlaneseq
  %v282 = vshrl.u32 %v281, 7
  %v283 = vsub.s32 %v280, %v282
  %v284 = vrot.slane %v276, %v283
  %v286 = vunpack.c.l.s4 1934713408
  %v287 = vunpack.c.0.s8 %v286
  %v288 = vlaneseq
  %v289 = vshrl.u32 %v288, 7
  %v290 = vsub.s32 %v287, %v289
  %v291 = vrot.slane %v277, %v290
  %v292 = vcombine.low %v227, %v243
  %v293 = vcombine.high %v227, %v243
  %v295 = vunpack.c.l.s4 1934713408
  %v296 = vunpack.c.0.s8 %v295
  %v297 = vlaneseq
  %v298 = vshrl.u32 %v297, 7
  %v299 = vsub.s32 %v296, %v298
  %v300 = vrot.slane %v292, %v299
  %v302 = vunpack.c.l.s4 1934713408
  %v303 = vunpack.c.0.s8 %v302
  %v304 = vlaneseq
  %v305 = vshrl.u32 %v304, 7
  %v306 = vsub.s32 %v303, %v305
  %v307 = vrot.slane %v293, %v306
  %v308 = vcombine.low %v252, %v284
  %v309 = vcombine.high %v252, %v284
  %v310 = vcombine.low %v259, %v291
  %v311 = vcombine.high %v259, %v291
  %v312 = vcombine.low %v268, %v300
  %v313 = vcombine.high %v268, %v300
  %v314 = vcombine.low %v275, %v307
  %v315 = vcombine.high %v275, %v307
  %v316 = vcombine.low %v122, %v163
  %v317 = vcombine.high %v122, %v163
  %v319 = vunpack.c.l.s4 1983009808
  %v320 = vunpack.c.0.s8 %v319
  %v321 = vlaneseq
  %v322 = vshrl.u32 %v321, 7
  %v323 = vsub.s32 %v320, %v322
  %v324 = vrot.slane %v316, %v323
  %v326 = vunpack.c.l.s4 1983009808
  %v327 = vunpack.c.0.s8 %v326
  %v328 = vlaneseq
  %v329 = vshrl.u32 %v328, 7
  %v330 = vsub.s32 %v327, %v329
  %v331 = vrot.slane %v317, %v330
  %v332 = vcombine.low %v160, %v166
  %v333 = vcombine.high %v160, %v166
  %v335 = vunpack.c.l.s4 1983009808
  %v336 = vunpack.c.0.s8 %v335
  %v337 = vlaneseq
  %v338 = vshrl.u32 %v337, 7
  %v339 = vsub.s32 %v336, %v338
  %v340 = vrot.slane %v332, %v339
  %v342 = vunpack.c.l.s4 1983009808
  %v343 = vunpack.c.0.s8 %v342
  %v344 = vlaneseq
  %v345 = vshrl.u32 %v344, 7
  %v346 = vsub.s32 %v343, %v345
  %v347 = vrot.slane %v333, %v346
  %v348 = vcombine.low %v169, %v175
  %v349 = vcombine.high %v169, %v175
  %v351 = vunpack.c.l.s4 1983009808
  %v352 = vunpack.c.0.s8 %v351
  %v353 = vlaneseq
  %v354 = vshrl.u32 %v353, 7
  %v355 = vsub.s32 %v352, %v354
  %v356 = vrot.slane %v348, %v355
  %v358 = vunpack.c.l.s4 1983009808
  %v359 = vunpack.c.0.s8 %v358
  %v360 = vlaneseq
  %v361 = vshrl.u32 %v360, 7
  %v362 = vsub.s32 %v359, %v361
  %v363 = vrot.slane %v349, %v362
  %v364 = vcombine.low %v172, %v178
  %v365 = vcombine.high %v172, %v178
  %v367 = vunpack.c.l.s4 1983009808
  %v368 = vunpack.c.0.s8 %v367
  %v369 = vlaneseq
  %v370 = vshrl.u32 %v369, 7
  %v371 = vsub.s32 %v368, %v370
  %v372 = vrot.slane %v364, %v371
  %v374 = vunpack.c.l.s4 1983009808
  %v375 = vunpack.c.0.s8 %v374
  %v376 = vlaneseq
  %v377 = vshrl.u32 %v376, 7
  %v378 = vsub.s32 %v375, %v377
  %v379 = vrot.slane %v365, %v378
  %v380 = vcombine.low %v324, %v340
  %v381 = vcombine.high %v324, %v340
  %v383 = vunpack.c.l.s4 1934713408
  %v384 = vunpack.c.0.s8 %v383
  %v385 = vlaneseq
  %v386 = vshrl.u32 %v385, 7
  %v387 = vsub.s32 %v384, %v386
  %v388 = vrot.slane %v380, %v387
  %v390 = vunpack.c.l.s4 1934713408
  %v391 = vunpack.c.0.s8 %v390
  %v392 = vlaneseq
  %v393 = vshrl.u32 %v392, 7
  %v394 = vsub.s32 %v391, %v393
  %v395 = vrot.slane %v381, %v394
  %v396 = vcombine.low %v331, %v347
  %v397 = vcombine.high %v331, %v347
  %v399 = vunpack.c.l.s4 1934713408
  %v400 = vunpack.c.0.s8 %v399
  %v401 = vlaneseq
  %v402 = vshrl.u32 %v401, 7
  %v403 = vsub.s32 %v400, %v402
  %v404 = vrot.slane %v396, %v403
  %v406 = vunpack.c.l.s4 1934713408
  %v407 = vunpack.c.0.s8 %v406
  %v408 = vlaneseq
  %v409 = vshrl.u32 %v408, 7
  %v410 = vsub.s32 %v407, %v409
  %v411 = vrot.slane %v397, %v410
  %v412 = vcombine.low %v356, %v372
  %v413 = vcombine.high %v356, %v372
  %v415 = vunpack.c.l.s4 1934713408
  %v416 = vunpack.c.0.s8 %v415
  %v417 = vlaneseq
  %v418 = vshrl.u32 %v417, 7
  %v419 = vsub.s32 %v416, %v418
  %v420 = vrot.slane %v412, %v419
  %v422 = vunpack.c.l.s4 1934713408
  %v423 = vunpack.c.0.s8 %v422
  %v424 = vlaneseq
  %v425 = vshrl.u32 %v424, 7
  %v426 = vsub.s32 %v423, %v425
  %v427 = vrot.slane %v413, %v426
  %v428 = vcombine.low %v363, %v379
  %v429 = vcombine.high %v363, %v379
  %v431 = vunpack.c.l.s4 1934713408
  %v432 = vunpack.c.0.s8 %v431
  %v433 = vlaneseq
  %v434 = vshrl.u32 %v433, 7
  %v435 = vsub.s32 %v432, %v434
  %v436 = vrot.slane %v428, %v435
  %v438 = vunpack.c.l.s4 1934713408
  %v439 = vunpack.c.0.s8 %v438
  %v440 = vlaneseq
  %v441 = vshrl.u32 %v440, 7
  %v442 = vsub.s32 %v439, %v441
  %v443 = vrot.slane %v429, %v442
  %v444 = vcombine.low %v388, %v420
  %v445 = vcombine.high %v388, %v420
  %v446 = vcombine.low %v395, %v427
  %v447 = vcombine.high %v395, %v427
  %v448 = vcombine.low %v404, %v436
  %v449 = vcombine.high %v404, %v436
  %v450 = vcombine.low %v411, %v443
  %v451 = vcombine.high %v411, %v443
  %453 = vrot.lane.b32.xlu0 %v126, 112
  %v454 = vpop.permute.xlu0 %453
  %456 = vrot.lane.b32.xlu0 %v126, 96
  %v457 = vpop.permute.xlu0 %456
  %459 = vrot.lane.b32.xlu0 %v126, 80
  %v460 = vpop.permute.xlu0 %459
  %462 = vrot.lane.b32.xlu0 %v126, 64
  %v463 = vpop.permute.xlu0 %462
  %465 = vrot.lane.b32.xlu0 %v126, 48
  %v466 = vpop.permute.xlu0 %465
  %468 = vrot.lane.b32.xlu0 %v126, 32
  %v469 = vpop.permute.xlu0 %468
  %471 = vrot.lane.b32.xlu0 %v126, 16
  %v472 = vpop.permute.xlu0 %471
  %475 = vrot.lane.b32.xlu0 %v128, 112
  %v476 = vpop.permute.xlu0 %475
  %478 = vrot.lane.b32.xlu0 %v128, 96
  %v479 = vpop.permute.xlu0 %478
  %481 = vrot.lane.b32.xlu0 %v128, 80
  %v482 = vpop.permute.xlu0 %481
  %484 = vrot.lane.b32.xlu0 %v128, 64
  %v485 = vpop.permute.xlu0 %484
  %487 = vrot.lane.b32.xlu0 %v128, 48
  %v488 = vpop.permute.xlu0 %487
  %490 = vrot.lane.b32.xlu0 %v128, 32
  %v491 = vpop.permute.xlu0 %490
  %493 = vrot.lane.b32.xlu0 %v128, 16
  %v494 = vpop.permute.xlu0 %493
  %v496 = vcombine.low %v126, %v457
  %v497 = vcombine.high %v126, %v457
  %v499 = vunpack.c.l.s4 1983009808
  %v500 = vunpack.c.0.s8 %v499
  %v501 = vlaneseq
  %v502 = vshrl.u32 %v501, 7
  %v503 = vsub.s32 %v500, %v502
  %v504 = vrot.slane %v496, %v503
  %v506 = vunpack.c.l.s4 1983009808
  %v507 = vunpack.c.0.s8 %v506
  %v508 = vlaneseq
  %v509 = vshrl.u32 %v508, 7
  %v510 = vsub.s32 %v507, %v509
  %v511 = vrot.slane %v497, %v510
  %v512 = vcombine.low %v454, %v460
  %v513 = vcombine.high %v454, %v460
  %v515 = vunpack.c.l.s4 1983009808
  %v516 = vunpack.c.0.s8 %v515
  %v517 = vlaneseq
  %v518 = vshrl.u32 %v517, 7
  %v519 = vsub.s32 %v516, %v518
  %v520 = vrot.slane %v512, %v519
  %v522 = vunpack.c.l.s4 1983009808
  %v523 = vunpack.c.0.s8 %v522
  %v524 = vlaneseq
  %v525 = vshrl.u32 %v524, 7
  %v526 = vsub.s32 %v523, %v525
  %v527 = vrot.slane %v513, %v526
  %v528 = vcombine.low %v463, %v469
  %v529 = vcombine.high %v463, %v469
  %v531 = vunpack.c.l.s4 1983009808
  %v532 = vunpack.c.0.s8 %v531
  %v533 = vlaneseq
  %v534 = vshrl.u32 %v533, 7
  %v535 = vsub.s32 %v532, %v534
  %v536 = vrot.slane %v528, %v535
  %v538 = vunpack.c.l.s4 1983009808
  %v539 = vunpack.c.0.s8 %v538
  %v540 = vlaneseq
  %v541 = vshrl.u32 %v540, 7
  %v542 = vsub.s32 %v539, %v541
  %v543 = vrot.slane %v529, %v542
  %v544 = vcombine.low %v466, %v472
  %v545 = vcombine.high %v466, %v472
  %v547 = vunpack.c.l.s4 1983009808
  %v548 = vunpack.c.0.s8 %v547
  %v549 = vlaneseq
  %v550 = vshrl.u32 %v549, 7
  %v551 = vsub.s32 %v548, %v550
  %v552 = vrot.slane %v544, %v551
  %v554 = vunpack.c.l.s4 1983009808
  %v555 = vunpack.c.0.s8 %v554
  %v556 = vlaneseq
  %v557 = vshrl.u32 %v556, 7
  %v558 = vsub.s32 %v555, %v557
  %v559 = vrot.slane %v545, %v558
  %v560 = vcombine.low %v504, %v520
  %v561 = vcombine.high %v504, %v520
  %v563 = vunpack.c.l.s4 1934713408
  %v564 = vunpack.c.0.s8 %v563
  %v565 = vlaneseq
  %v566 = vshrl.u32 %v565, 7
  %v567 = vsub.s32 %v564, %v566
  %v568 = vrot.slane %v560, %v567
  %v570 = vunpack.c.l.s4 1934713408
  %v571 = vunpack.c.0.s8 %v570
  %v572 = vlaneseq
  %v573 = vshrl.u32 %v572, 7
  %v574 = vsub.s32 %v571, %v573
  %v575 = vrot.slane %v561, %v574
  %v576 = vcombine.low %v511, %v527
  %v577 = vcombine.high %v511, %v527
  %v579 = vunpack.c.l.s4 1934713408
  %v580 = vunpack.c.0.s8 %v579
  %v581 = vlaneseq
  %v582 = vshrl.u32 %v581, 7
  %v583 = vsub.s32 %v580, %v582
  %v584 = vrot.slane %v576, %v583
  %v586 = vunpack.c.l.s4 1934713408
  %v587 = vunpack.c.0.s8 %v586
  %v588 = vlaneseq
  %v589 = vshrl.u32 %v588, 7
  %v590 = vsub.s32 %v587, %v589
  %v591 = vrot.slane %v577, %v590
  %v592 = vcombine.low %v536, %v552
  %v593 = vcombine.high %v536, %v552
  %v595 = vunpack.c.l.s4 1934713408
  %v596 = vunpack.c.0.s8 %v595
  %v597 = vlaneseq
  %v598 = vshrl.u32 %v597, 7
  %v599 = vsub.s32 %v596, %v598
  %v600 = vrot.slane %v592, %v599
  %v602 = vunpack.c.l.s4 1934713408
  %v603 = vunpack.c.0.s8 %v602
  %v604 = vlaneseq
  %v605 = vshrl.u32 %v604, 7
  %v606 = vsub.s32 %v603, %v605
  %v607 = vrot.slane %v593, %v606
  %v608 = vcombine.low %v543, %v559
  %v609 = vcombine.high %v543, %v559
  %v611 = vunpack.c.l.s4 1934713408
  %v612 = vunpack.c.0.s8 %v611
  %v613 = vlaneseq
  %v614 = vshrl.u32 %v613, 7
  %v615 = vsub.s32 %v612, %v614
  %v616 = vrot.slane %v608, %v615
  %v618 = vunpack.c.l.s4 1934713408
  %v619 = vunpack.c.0.s8 %v618
  %v620 = vlaneseq
  %v621 = vshrl.u32 %v620, 7
  %v622 = vsub.s32 %v619, %v621
  %v623 = vrot.slane %v609, %v622
  %v624 = vcombine.low %v568, %v600
  %v625 = vcombine.high %v568, %v600
  %v626 = vcombine.low %v575, %v607
  %v627 = vcombine.high %v575, %v607
  %v628 = vcombine.low %v584, %v616
  %v629 = vcombine.high %v584, %v616
  %v630 = vcombine.low %v591, %v623
  %v631 = vcombine.high %v591, %v623
  %v632 = vcombine.low %v128, %v479
  %v633 = vcombine.high %v128, %v479
  %v635 = vunpack.c.l.s4 1983009808
  %v636 = vunpack.c.0.s8 %v635
  %v637 = vlaneseq
  %v638 = vshrl.u32 %v637, 7
  %v639 = vsub.s32 %v636, %v638
  %v640 = vrot.slane %v632, %v639
  %v642 = vunpack.c.l.s4 1983009808
  %v643 = vunpack.c.0.s8 %v642
  %v644 = vlaneseq
  %v645 = vshrl.u32 %v644, 7
  %v646 = vsub.s32 %v643, %v645
  %v647 = vrot.slane %v633, %v646
  %v648 = vcombine.low %v476, %v482
  %v649 = vcombine.high %v476, %v482
  %v651 = vunpack.c.l.s4 1983009808
  %v652 = vunpack.c.0.s8 %v651
  %v653 = vlaneseq
  %v654 = vshrl.u32 %v653, 7
  %v655 = vsub.s32 %v652, %v654
  %v656 = vrot.slane %v648, %v655
  %v658 = vunpack.c.l.s4 1983009808
  %v659 = vunpack.c.0.s8 %v658
  %v660 = vlaneseq
  %v661 = vshrl.u32 %v660, 7
  %v662 = vsub.s32 %v659, %v661
  %v663 = vrot.slane %v649, %v662
  %v664 = vcombine.low %v485, %v491
  %v665 = vcombine.high %v485, %v491
  %v667 = vunpack.c.l.s4 1983009808
  %v668 = vunpack.c.0.s8 %v667
  %v669 = vlaneseq
  %v670 = vshrl.u32 %v669, 7
  %v671 = vsub.s32 %v668, %v670
  %v672 = vrot.slane %v664, %v671
  %v674 = vunpack.c.l.s4 1983009808
  %v675 = vunpack.c.0.s8 %v674
  %v676 = vlaneseq
  %v677 = vshrl.u32 %v676, 7
  %v678 = vsub.s32 %v675, %v677
  %v679 = vrot.slane %v665, %v678
  %v680 = vcombine.low %v488, %v494
  %v681 = vcombine.high %v488, %v494
  %v683 = vunpack.c.l.s4 1983009808
  %v684 = vunpack.c.0.s8 %v683
  %v685 = vlaneseq
  %v686 = vshrl.u32 %v685, 7
  %v687 = vsub.s32 %v684, %v686
  %v688 = vrot.slane %v680, %v687
  %v690 = vunpack.c.l.s4 1983009808
  %v691 = vunpack.c.0.s8 %v690
  %v692 = vlaneseq
  %v693 = vshrl.u32 %v692, 7
  %v694 = vsub.s32 %v691, %v693
  %v695 = vrot.slane %v681, %v694
  %v696 = vcombine.low %v640, %v656
  %v697 = vcombine.high %v640, %v656
  %v699 = vunpack.c.l.s4 1934713408
  %v700 = vunpack.c.0.s8 %v699
  %v701 = vlaneseq
  %v702 = vshrl.u32 %v701, 7
  %v703 = vsub.s32 %v700, %v702
  %v704 = vrot.slane %v696, %v703
  %v706 = vunpack.c.l.s4 1934713408
  %v707 = vunpack.c.0.s8 %v706
  %v708 = vlaneseq
  %v709 = vshrl.u32 %v708, 7
  %v710 = vsub.s32 %v707, %v709
  %v711 = vrot.slane %v697, %v710
  %v712 = vcombine.low %v647, %v663
  %v713 = vcombine.high %v647, %v663
  %v715 = vunpack.c.l.s4 1934713408
  %v716 = vunpack.c.0.s8 %v715
  %v717 = vlaneseq
  %v718 = vshrl.u32 %v717, 7
  %v719 = vsub.s32 %v716, %v718
  %v720 = vrot.slane %v712, %v719
  %v722 = vunpack.c.l.s4 1934713408
  %v723 = vunpack.c.0.s8 %v722
  %v724 = vlaneseq
  %v725 = vshrl.u32 %v724, 7
  %v726 = vsub.s32 %v723, %v725
  %v727 = vrot.slane %v713, %v726
  %v728 = vcombine.low %v672, %v688
  %v729 = vcombine.high %v672, %v688
  %v731 = vunpack.c.l.s4 1934713408
  %v732 = vunpack.c.0.s8 %v731
  %v733 = vlaneseq
  %v734 = vshrl.u32 %v733, 7
  %v735 = vsub.s32 %v732, %v734
  %v736 = vrot.slane %v728, %v735
  %v738 = vunpack.c.l.s4 1934713408
  %v739 = vunpack.c.0.s8 %v738
  %v740 = vlaneseq
  %v741 = vshrl.u32 %v740, 7
  %v742 = vsub.s32 %v739, %v741
  %v743 = vrot.slane %v729, %v742
  %v744 = vcombine.low %v679, %v695
  %v745 = vcombine.high %v679, %v695
  %v747 = vunpack.c.l.s4 1934713408
  %v748 = vunpack.c.0.s8 %v747
  %v749 = vlaneseq
  %v750 = vshrl.u32 %v749, 7
  %v751 = vsub.s32 %v748, %v750
  %v752 = vrot.slane %v744, %v751
  %v754 = vunpack.c.l.s4 1934713408
  %v755 = vunpack.c.0.s8 %v754
  %v756 = vlaneseq
  %v757 = vshrl.u32 %v756, 7
  %v758 = vsub.s32 %v755, %v757
  %v759 = vrot.slane %v745, %v758
  %v760 = vcombine.low %v704, %v736
  %v761 = vcombine.high %v704, %v736
  %v762 = vcombine.low %v711, %v743
  %v763 = vcombine.high %v711, %v743
  %v764 = vcombine.low %v720, %v752
  %v765 = vcombine.high %v720, %v752
  %v766 = vcombine.low %v727, %v759
  %v767 = vcombine.high %v727, %v759
  %769 = vrot.lane.b32.xlu0 %v132, 112
  %v770 = vpop.permute.xlu0 %769
  %772 = vrot.lane.b32.xlu0 %v132, 96
  %v773 = vpop.permute.xlu0 %772
  %775 = vrot.lane.b32.xlu0 %v132, 80
  %v776 = vpop.permute.xlu0 %775
  %778 = vrot.lane.b32.xlu0 %v132, 64
  %v779 = vpop.permute.xlu0 %778
  %781 = vrot.lane.b32.xlu0 %v132, 48
  %v782 = vpop.permute.xlu0 %781
  %784 = vrot.lane.b32.xlu0 %v132, 32
  %v785 = vpop.permute.xlu0 %784
  %787 = vrot.lane.b32.xlu0 %v132, 16
  %v788 = vpop.permute.xlu0 %787
  %791 = vrot.lane.b32.xlu0 %v134, 112
  %v792 = vpop.permute.xlu0 %791
  %794 = vrot.lane.b32.xlu0 %v134, 96
  %v795 = vpop.permute.xlu0 %794
  %797 = vrot.lane.b32.xlu0 %v134, 80
  %v798 = vpop.permute.xlu0 %797
  %800 = vrot.lane.b32.xlu0 %v134, 64
  %v801 = vpop.permute.xlu0 %800
  %803 = vrot.lane.b32.xlu0 %v134, 48
  %v804 = vpop.permute.xlu0 %803
  %806 = vrot.lane.b32.xlu0 %v134, 32
  %v807 = vpop.permute.xlu0 %806
  %809 = vrot.lane.b32.xlu0 %v134, 16
  %v810 = vpop.permute.xlu0 %809
  %v812 = vcombine.low %v132, %v773
  %v813 = vcombine.high %v132, %v773
  %v815 = vunpack.c.l.s4 1983009808
  %v816 = vunpack.c.0.s8 %v815
  %v817 = vlaneseq
  %v818 = vshrl.u32 %v817, 7
  %v819 = vsub.s32 %v816, %v818
  %v820 = vrot.slane %v812, %v819
  %v822 = vunpack.c.l.s4 1983009808
  %v823 = vunpack.c.0.s8 %v822
  %v824 = vlaneseq
  %v825 = vshrl.u32 %v824, 7
  %v826 = vsub.s32 %v823, %v825
  %v827 = vrot.slane %v813, %v826
  %v828 = vcombine.low %v770, %v776
  %v829 = vcombine.high %v770, %v776
  %v831 = vunpack.c.l.s4 1983009808
  %v832 = vunpack.c.0.s8 %v831
  %v833 = vlaneseq
  %v834 = vshrl.u32 %v833, 7
  %v835 = vsub.s32 %v832, %v834
  %v836 = vrot.slane %v828, %v835
  %v838 = vunpack.c.l.s4 1983009808
  %v839 = vunpack.c.0.s8 %v838
  %v840 = vlaneseq
  %v841 = vshrl.u32 %v840, 7
  %v842 = vsub.s32 %v839, %v841
  %v843 = vrot.slane %v829, %v842
  %v844 = vcombine.low %v779, %v785
  %v845 = vcombine.high %v779, %v785
  %v847 = vunpack.c.l.s4 1983009808
  %v848 = vunpack.c.0.s8 %v847
  %v849 = vlaneseq
  %v850 = vshrl.u32 %v849, 7
  %v851 = vsub.s32 %v848, %v850
  %v852 = vrot.slane %v844, %v851
  %v854 = vunpack.c.l.s4 1983009808
  %v855 = vunpack.c.0.s8 %v854
  %v856 = vlaneseq
  %v857 = vshrl.u32 %v856, 7
  %v858 = vsub.s32 %v855, %v857
  %v859 = vrot.slane %v845, %v858
  %v860 = vcombine.low %v782, %v788
  %v861 = vcombine.high %v782, %v788
  %v863 = vunpack.c.l.s4 1983009808
  %v864 = vunpack.c.0.s8 %v863
  %v865 = vlaneseq
  %v866 = vshrl.u32 %v865, 7
  %v867 = vsub.s32 %v864, %v866
  %v868 = vrot.slane %v860, %v867
  %v870 = vunpack.c.l.s4 1983009808
  %v871 = vunpack.c.0.s8 %v870
  %v872 = vlaneseq
  %v873 = vshrl.u32 %v872, 7
  %v874 = vsub.s32 %v871, %v873
  %v875 = vrot.slane %v861, %v874
  %v876 = vcombine.low %v820, %v836
  %v877 = vcombine.high %v820, %v836
  %v879 = vunpack.c.l.s4 1934713408
  %v880 = vunpack.c.0.s8 %v879
  %v881 = vlaneseq
  %v882 = vshrl.u32 %v881, 7
  %v883 = vsub.s32 %v880, %v882
  %v884 = vrot.slane %v876, %v883
  %v886 = vunpack.c.l.s4 1934713408
  %v887 = vunpack.c.0.s8 %v886
  %v888 = vlaneseq
  %v889 = vshrl.u32 %v888, 7
  %v890 = vsub.s32 %v887, %v889
  %v891 = vrot.slane %v877, %v890
  %v892 = vcombine.low %v827, %v843
  %v893 = vcombine.high %v827, %v843
  %v895 = vunpack.c.l.s4 1934713408
  %v896 = vunpack.c.0.s8 %v895
  %v897 = vlaneseq
  %v898 = vshrl.u32 %v897, 7
  %v899 = vsub.s32 %v896, %v898
  %v900 = vrot.slane %v892, %v899
  %v902 = vunpack.c.l.s4 1934713408
  %v903 = vunpack.c.0.s8 %v902
  %v904 = vlaneseq
  %v905 = vshrl.u32 %v904, 7
  %v906 = vsub.s32 %v903, %v905
  %v907 = vrot.slane %v893, %v906
  %v908 = vcombine.low %v852, %v868
  %v909 = vcombine.high %v852, %v868
  %v911 = vunpack.c.l.s4 1934713408
  %v912 = vunpack.c.0.s8 %v911
  %v913 = vlaneseq
  %v914 = vshrl.u32 %v913, 7
  %v915 = vsub.s32 %v912, %v914
  %v916 = vrot.slane %v908, %v915
  %v918 = vunpack.c.l.s4 1934713408
  %v919 = vunpack.c.0.s8 %v918
  %v920 = vlaneseq
  %v921 = vshrl.u32 %v920, 7
  %v922 = vsub.s32 %v919, %v921
  %v923 = vrot.slane %v909, %v922
  %v924 = vcombine.low %v859, %v875
  %v925 = vcombine.high %v859, %v875
  %v927 = vunpack.c.l.s4 1934713408
  %v928 = vunpack.c.0.s8 %v927
  %v929 = vlaneseq
  %v930 = vshrl.u32 %v929, 7
  %v931 = vsub.s32 %v928, %v930
  %v932 = vrot.slane %v924, %v931
  %v934 = vunpack.c.l.s4 1934713408
  %v935 = vunpack.c.0.s8 %v934
  %v936 = vlaneseq
  %v937 = vshrl.u32 %v936, 7
  %v938 = vsub.s32 %v935, %v937
  %v939 = vrot.slane %v925, %v938
  %v940 = vcombine.low %v884, %v916
  %v941 = vcombine.high %v884, %v916
  %v942 = vcombine.low %v891, %v923
  %v943 = vcombine.high %v891, %v923
  %v944 = vcombine.low %v900, %v932
  %v945 = vcombine.high %v900, %v932
  %v946 = vcombine.low %v907, %v939
  %v947 = vcombine.high %v907, %v939
  %v948 = vcombine.low %v134, %v795
  %v949 = vcombine.high %v134, %v795
  %v951 = vunpack.c.l.s4 1983009808
  %v952 = vunpack.c.0.s8 %v951
  %v953 = vlaneseq
  %v954 = vshrl.u32 %v953, 7
  %v955 = vsub.s32 %v952, %v954
  %v956 = vrot.slane %v948, %v955
  %v958 = vunpack.c.l.s4 1983009808
  %v959 = vunpack.c.0.s8 %v958
  %v960 = vlaneseq
  %v961 = vshrl.u32 %v960, 7
  %v962 = vsub.s32 %v959, %v961
  %v963 = vrot.slane %v949, %v962
  %v964 = vcombine.low %v792, %v798
  %v965 = vcombine.high %v792, %v798
  %v967 = vunpack.c.l.s4 1983009808
  %v968 = vunpack.c.0.s8 %v967
  %v969 = vlaneseq
  %v970 = vshrl.u32 %v969, 7
  %v971 = vsub.s32 %v968, %v970
  %v972 = vrot.slane %v964, %v971
  %v974 = vunpack.c.l.s4 1983009808
  %v975 = vunpack.c.0.s8 %v974
  %v976 = vlaneseq
  %v977 = vshrl.u32 %v976, 7
  %v978 = vsub.s32 %v975, %v977
  %v979 = vrot.slane %v965, %v978
  %v980 = vcombine.low %v801, %v807
  %v981 = vcombine.high %v801, %v807
  %v983 = vunpack.c.l.s4 1983009808
  %v984 = vunpack.c.0.s8 %v983
  %v985 = vlaneseq
  %v986 = vshrl.u32 %v985, 7
  %v987 = vsub.s32 %v984, %v986
  %v988 = vrot.slane %v980, %v987
  %v990 = vunpack.c.l.s4 1983009808
  %v991 = vunpack.c.0.s8 %v990
  %v992 = vlaneseq
  %v993 = vshrl.u32 %v992, 7
  %v994 = vsub.s32 %v991, %v993
  %v995 = vrot.slane %v981, %v994
  %v996 = vcombine.low %v804, %v810
  %v997 = vcombine.high %v804, %v810
  %v999 = vunpack.c.l.s4 1983009808
  %v1000 = vunpack.c.0.s8 %v999
  %v1001 = vlaneseq
  %v1002 = vshrl.u32 %v1001, 7
  %v1003 = vsub.s32 %v1000, %v1002
  %v1004 = vrot.slane %v996, %v1003
  %v1006 = vunpack.c.l.s4 1983009808
  %v1007 = vunpack.c.0.s8 %v1006
  %v1008 = vlaneseq
  %v1009 = vshrl.u32 %v1008, 7
  %v1010 = vsub.s32 %v1007, %v1009
  %v1011 = vrot.slane %v997, %v1010
  %v1012 = vcombine.low %v956, %v972
  %v1013 = vcombine.high %v956, %v972
  %v1015 = vunpack.c.l.s4 1934713408
  %v1016 = vunpack.c.0.s8 %v1015
  %v1017 = vlaneseq
  %v1018 = vshrl.u32 %v1017, 7
  %v1019 = vsub.s32 %v1016, %v1018
  %v1020 = vrot.slane %v1012, %v1019
  %v1022 = vunpack.c.l.s4 1934713408
  %v1023 = vunpack.c.0.s8 %v1022
  %v1024 = vlaneseq
  %v1025 = vshrl.u32 %v1024, 7
  %v1026 = vsub.s32 %v1023, %v1025
  %v1027 = vrot.slane %v1013, %v1026
  %v1028 = vcombine.low %v963, %v979
  %v1029 = vcombine.high %v963, %v979
  %v1031 = vunpack.c.l.s4 1934713408
  %v1032 = vunpack.c.0.s8 %v1031
  %v1033 = vlaneseq
  %v1034 = vshrl.u32 %v1033, 7
  %v1035 = vsub.s32 %v1032, %v1034
  %v1036 = vrot.slane %v1028, %v1035
  %v1038 = vunpack.c.l.s4 1934713408
  %v1039 = vunpack.c.0.s8 %v1038
  %v1040 = vlaneseq
  %v1041 = vshrl.u32 %v1040, 7
  %v1042 = vsub.s32 %v1039, %v1041
  %v1043 = vrot.slane %v1029, %v1042
  %v1044 = vcombine.low %v988, %v1004
  %v1045 = vcombine.high %v988, %v1004
  %v1047 = vunpack.c.l.s4 1934713408
  %v1048 = vunpack.c.0.s8 %v1047
  %v1049 = vlaneseq
  %v1050 = vshrl.u32 %v1049, 7
  %v1051 = vsub.s32 %v1048, %v1050
  %v1052 = vrot.slane %v1044, %v1051
  %v1054 = vunpack.c.l.s4 1934713408
  %v1055 = vunpack.c.0.s8 %v1054
  %v1056 = vlaneseq
  %v1057 = vshrl.u32 %v1056, 7
  %v1058 = vsub.s32 %v1055, %v1057
  %v1059 = vrot.slane %v1045, %v1058
  %v1060 = vcombine.low %v995, %v1011
  %v1061 = vcombine.high %v995, %v1011
  %v1063 = vunpack.c.l.s4 1934713408
  %v1064 = vunpack.c.0.s8 %v1063
  %v1065 = vlaneseq
  %v1066 = vshrl.u32 %v1065, 7
  %v1067 = vsub.s32 %v1064, %v1066
  %v1068 = vrot.slane %v1060, %v1067
  %v1070 = vunpack.c.l.s4 1934713408
  %v1071 = vunpack.c.0.s8 %v1070
  %v1072 = vlaneseq
  %v1073 = vshrl.u32 %v1072, 7
  %v1074 = vsub.s32 %v1071, %v1073
  %v1075 = vrot.slane %v1061, %v1074
  %v1076 = vcombine.low %v1020, %v1052
  %v1077 = vcombine.high %v1020, %v1052
  %v1078 = vcombine.low %v1027, %v1059
  %v1079 = vcombine.high %v1027, %v1059
  %v1080 = vcombine.low %v1036, %v1068
  %v1081 = vcombine.high %v1036, %v1068
  %v1082 = vcombine.low %v1043, %v1075
  %v1083 = vcombine.high %v1043, %v1075
  %vm1084 = vcmask 130048
  %v1086 = vsel %vm1084, %v308, 0
  %v1089 = vsel %vm1084, %v444, 0
  %v1092 = vsel %vm1084, %v624, 0
  %v1095 = vsel %vm1084, %v760, 0
  %1097 = vmatprep.subr.mxu0 0.0
  %1098 = vmatpush1.xpose.msra.mxu0 0.0
  %1099 = vmatprep.subr.mxu0 0.0
  %1100 = vmatpush1.xpose.msra.mxu0 0.0
  %1101 = vmatprep.subr.mxu0 0.0
  %1102 = vmatpush1.xpose.msra.mxu0 0.0
  %1103 = vmatprep.subr.mxu0 0.0
  %1104 = vmatpush1.xpose.msra.mxu0 0.0
  %1105 = vmatprep.subr.mxu0 0.0
  %1106 = vmatpush1.xpose.msra.mxu0 0.0
  %1107 = vmatprep.subr.mxu0 0.0
  %1108 = vmatpush1.xpose.msra.mxu0 0.0
  %1109 = vmatprep.subr.mxu0 0.0
  %1110 = vmatpush1.xpose.msra.mxu0 0.0
  %1111 = vmatprep.subr.mxu0 0.0
  %1112 = vmatpush1.xpose.msra.mxu0 0.0
  %1113 = vmatprep.subr.mxu0 0.0
  %1114 = vmatpush1.xpose.msra.mxu0 0.0
  %1115 = vmatprep.subr.mxu0 0.0
  %1116 = vmatpush1.xpose.msra.mxu0 0.0
  %1117 = vmatprep.subr.mxu0 0.0
  %1118 = vmatpush1.xpose.msra.mxu0 0.0
  %1119 = vmatprep.subr.mxu0 0.0
  %1120 = vmatpush1.xpose.msra.mxu0 0.0
  %1121 = vmatprep.subr.mxu0 0.0
  %1122 = vmatpush1.xpose.msra.mxu0 0.0
  %1123 = vmatprep.subr.mxu0 0.0
  %1124 = vmatpush1.xpose.msra.mxu0 0.0
  %1125 = vmatprep.subr.mxu0 0.0
  %1126 = vmatpush1.xpose.msra.mxu0 %v1095
  %1127 = vmatprep.subr.mxu0 0.0
  %1128 = vmatpush1.xpose.msra.mxu0 %v1092
  %1129 = vmatprep.subr.mxu0 0.0
  %1130 = vmatpush2.xpose.msra.mxu0 0.0
  %1131 = vmatprep.subr.mxu0 0.0
  %1132 = vmatpush2.xpose.msra.mxu0 0.0
  %1133 = vmatprep.subr.mxu0 0.0
  %1134 = vmatpush2.xpose.msra.mxu0 0.0
  %1135 = vmatprep.subr.mxu0 0.0
  %1136 = vmatpush2.xpose.msra.mxu0 0.0
  %1137 = vmatprep.subr.mxu0 0.0
  %1138 = vmatpush2.xpose.msra.mxu0 0.0
  %1139 = vmatprep.subr.mxu0 0.0
  %1140 = vmatpush2.xpose.msra.mxu0 0.0
  %1141 = vmatprep.subr.mxu0 0.0
  %1142 = vmatpush2.xpose.msra.mxu0 0.0
  %1143 = vmatprep.subr.mxu0 0.0
  %1144 = vmatpush2.xpose.msra.mxu0 0.0
  %1145 = vmatprep.subr.mxu0 0.0
  %1146 = vmatpush2.xpose.msra.mxu0 0.0
  %1147 = vmatprep.subr.mxu0 0.0
  %1148 = vmatpush2.xpose.msra.mxu0 0.0
  %1149 = vmatprep.subr.mxu0 0.0
  %1150 = vmatpush2.xpose.msra.mxu0 0.0
  %1151 = vmatprep.subr.mxu0 0.0
  %1152 = vmatpush2.xpose.msra.mxu0 0.0
  %1153 = vmatprep.subr.mxu0 0.0
  %1154 = vmatpush2.xpose.msra.mxu0 0.0
  %1155 = vmatprep.subr.mxu0 0.0
  %1156 = vmatpush2.xpose.msra.mxu0 0.0
  %1157 = vmatprep.subr.mxu0 0.0
  %1158 = vmatpush2.xpose.msra.mxu0 0.0
  %1159 = vmatprep.subr.mxu0 0.0
  %1160 = vmatpush2.xpose.msra.mxu0 0.0
  %1161 = vmatprep.mubr.f32.mxu0 0.0
  %1162 = vmatmul.mubr.f32.gmra.mxu0 %v1086
  %v1163 = vpop.f32.mrf.mxu0
  %v1164 = vadd.f32 0.0, %v1163
  %v1165 = vpop.f32.mrf.mxu0
  %1166 = vmatprep.mubr.f32.mxu0 0.0
  %1167 = vmatmul.mubr.f32.gmra.mxu0 %v1089
  %v1168 = vpop.f32.mrf.mxu0
  %v1169 = vadd.f32 0.0, %v1168
  %v1170 = vpop.f32.mrf.mxu0
  %1171 = vdwg.mxu0
  %v1173 = vsel %vm1084, %v309, 0
  %v1176 = vsel %vm1084, %v445, 0
  %v1179 = vsel %vm1084, %v625, 0
  %v1182 = vsel %vm1084, %v761, 0
  %1184 = vmatprep.subr.mxu0 0.0
  %1185 = vmatpush1.xpose.msra.mxu0 0.0
  %1186 = vmatprep.subr.mxu0 0.0
  %1187 = vmatpush1.xpose.msra.mxu0 0.0
  %1188 = vmatprep.subr.mxu0 0.0
  %1189 = vmatpush1.xpose.msra.mxu0 0.0
  %1190 = vmatprep.subr.mxu0 0.0
  %1191 = vmatpush1.xpose.msra.mxu0 0.0
  %1192 = vmatprep.subr.mxu0 0.0
  %1193 = vmatpush1.xpose.msra.mxu0 0.0
  %1194 = vmatprep.subr.mxu0 0.0
  %1195 = vmatpush1.xpose.msra.mxu0 0.0
  %1196 = vmatprep.subr.mxu0 0.0
  %1197 = vmatpush1.xpose.msra.mxu0 0.0
  %1198 = vmatprep.subr.mxu0 0.0
  %1199 = vmatpush1.xpose.msra.mxu0 0.0
  %1200 = vmatprep.subr.mxu0 0.0
  %1201 = vmatpush1.xpose.msra.mxu0 0.0
  %1202 = vmatprep.subr.mxu0 0.0
  %1203 = vmatpush1.xpose.msra.mxu0 0.0
  %1204 = vmatprep.subr.mxu0 0.0
  %1205 = vmatpush1.xpose.msra.mxu0 0.0
  %1206 = vmatprep.subr.mxu0 0.0
  %1207 = vmatpush1.xpose.msra.mxu0 0.0
  %1208 = vmatprep.subr.mxu0 0.0
  %1209 = vmatpush1.xpose.msra.mxu0 0.0
  %1210 = vmatprep.subr.mxu0 0.0
  %1211 = vmatpush1.xpose.msra.mxu0 0.0
  %1212 = vmatprep.subr.mxu0 0.0
  %1213 = vmatpush1.xpose.msra.mxu0 %v1182
  %1214 = vmatprep.subr.mxu0 0.0
  %1215 = vmatpush1.xpose.msra.mxu0 %v1179
  %1216 = vmatprep.subr.mxu0 0.0
  %1217 = vmatpush2.xpose.msra.mxu0 0.0
  %1218 = vmatprep.subr.mxu0 0.0
  %1219 = vmatpush2.xpose.msra.mxu0 0.0
  %1220 = vmatprep.subr.mxu0 0.0
  %1221 = vmatpush2.xpose.msra.mxu0 0.0
  %1222 = vmatprep.subr.mxu0 0.0
  %1223 = vmatpush2.xpose.msra.mxu0 0.0
  %1224 = vmatprep.subr.mxu0 0.0
  %1225 = vmatpush2.xpose.msra.mxu0 0.0
  %1226 = vmatprep.subr.mxu0 0.0
  %1227 = vmatpush2.xpose.msra.mxu0 0.0
  %1228 = vmatprep.subr.mxu0 0.0
  %1229 = vmatpush2.xpose.msra.mxu0 0.0
  %1230 = vmatprep.subr.mxu0 0.0
  %1231 = vmatpush2.xpose.msra.mxu0 0.0
  %1232 = vmatprep.subr.mxu0 0.0
  %1233 = vmatpush2.xpose.msra.mxu0 0.0
  %1234 = vmatprep.subr.mxu0 0.0
  %1235 = vmatpush2.xpose.msra.mxu0 0.0
  %1236 = vmatprep.subr.mxu0 0.0
  %1237 = vmatpush2.xpose.msra.mxu0 0.0
  %1238 = vmatprep.subr.mxu0 0.0
  %1239 = vmatpush2.xpose.msra.mxu0 0.0
  %1240 = vmatprep.subr.mxu0 0.0
  %1241 = vmatpush2.xpose.msra.mxu0 0.0
  %1242 = vmatprep.subr.mxu0 0.0
  %1243 = vmatpush2.xpose.msra.mxu0 0.0
  %1244 = vmatprep.subr.mxu0 0.0
  %1245 = vmatpush2.xpose.msra.mxu0 0.0
  %1246 = vmatprep.subr.mxu0 0.0
  %1247 = vmatpush2.xpose.msra.mxu0 0.0
  %1248 = vmatprep.mubr.f32.mxu0 0.0
  %1249 = vmatmul.mubr.f32.gmra.mxu0 %v1173
  %v1250 = vpop.f32.mrf.mxu0
  %v1251 = vadd.f32 0.0, %v1250
  %v1252 = vpop.f32.mrf.mxu0
  %1253 = vmatprep.mubr.f32.mxu0 0.0
  %1254 = vmatmul.mubr.f32.gmra.mxu0 %v1176
  %v1255 = vpop.f32.mrf.mxu0
  %v1256 = vadd.f32 0.0, %v1255
  %v1257 = vpop.f32.mrf.mxu0
  %1258 = vdwg.mxu0
  %v1260 = vsel %vm1084, %v310, 0
  %v1263 = vsel %vm1084, %v446, 0
  %v1266 = vsel %vm1084, %v626, 0
  %v1269 = vsel %vm1084, %v762, 0
  %1271 = vmatprep.subr.mxu0 0.0
  %1272 = vmatpush1.xpose.msra.mxu0 0.0
  %1273 = vmatprep.subr.mxu0 0.0
  %1274 = vmatpush1.xpose.msra.mxu0 0.0
  %1275 = vmatprep.subr.mxu0 0.0
  %1276 = vmatpush1.xpose.msra.mxu0 0.0
  %1277 = vmatprep.subr.mxu0 0.0
  %1278 = vmatpush1.xpose.msra.mxu0 0.0
  %1279 = vmatprep.subr.mxu0 0.0
  %1280 = vmatpush1.xpose.msra.mxu0 0.0
  %1281 = vmatprep.subr.mxu0 0.0
  %1282 = vmatpush1.xpose.msra.mxu0 0.0
  %1283 = vmatprep.subr.mxu0 0.0
  %1284 = vmatpush1.xpose.msra.mxu0 0.0
  %1285 = vmatprep.subr.mxu0 0.0
  %1286 = vmatpush1.xpose.msra.mxu0 0.0
  %1287 = vmatprep.subr.mxu0 0.0
  %1288 = vmatpush1.xpose.msra.mxu0 0.0
  %1289 = vmatprep.subr.mxu0 0.0
  %1290 = vmatpush1.xpose.msra.mxu0 0.0
  %1291 = vmatprep.subr.mxu0 0.0
  %1292 = vmatpush1.xpose.msra.mxu0 0.0
  %1293 = vmatprep.subr.mxu0 0.0
  %1294 = vmatpush1.xpose.msra.mxu0 0.0
  %1295 = vmatprep.subr.mxu0 0.0
  %1296 = vmatpush1.xpose.msra.mxu0 0.0
  %1297 = vmatprep.subr.mxu0 0.0
  %1298 = vmatpush1.xpose.msra.mxu0 0.0
  %1299 = vmatprep.subr.mxu0 0.0
  %1300 = vmatpush1.xpose.msra.mxu0 %v1269
  %1301 = vmatprep.subr.mxu0 0.0
  %1302 = vmatpush1.xpose.msra.mxu0 %v1266
  %1303 = vmatprep.subr.mxu0 0.0
  %1304 = vmatpush2.xpose.msra.mxu0 0.0
  %1305 = vmatprep.subr.mxu0 0.0
  %1306 = vmatpush2.xpose.msra.mxu0 0.0
  %1307 = vmatprep.subr.mxu0 0.0
  %1308 = vmatpush2.xpose.msra.mxu0 0.0
  %1309 = vmatprep.subr.mxu0 0.0
  %1310 = vmatpush2.xpose.msra.mxu0 0.0
  %1311 = vmatprep.subr.mxu0 0.0
  %1312 = vmatpush2.xpose.msra.mxu0 0.0
  %1313 = vmatprep.subr.mxu0 0.0
  %1314 = vmatpush2.xpose.msra.mxu0 0.0
  %1315 = vmatprep.subr.mxu0 0.0
  %1316 = vmatpush2.xpose.msra.mxu0 0.0
  %1317 = vmatprep.subr.mxu0 0.0
  %1318 = vmatpush2.xpose.msra.mxu0 0.0
  %1319 = vmatprep.subr.mxu0 0.0
  %1320 = vmatpush2.xpose.msra.mxu0 0.0
  %1321 = vmatprep.subr.mxu0 0.0
  %1322 = vmatpush2.xpose.msra.mxu0 0.0
  %1323 = vmatprep.subr.mxu0 0.0
  %1324 = vmatpush2.xpose.msra.mxu0 0.0
  %1325 = vmatprep.subr.mxu0 0.0
  %1326 = vmatpush2.xpose.msra.mxu0 0.0
  %1327 = vmatprep.subr.mxu0 0.0
  %1328 = vmatpush2.xpose.msra.mxu0 0.0
  %1329 = vmatprep.subr.mxu0 0.0
  %1330 = vmatpush2.xpose.msra.mxu0 0.0
  %1331 = vmatprep.subr.mxu0 0.0
  %1332 = vmatpush2.xpose.msra.mxu0 0.0
  %1333 = vmatprep.subr.mxu0 0.0
  %1334 = vmatpush2.xpose.msra.mxu0 0.0
  %1335 = vmatprep.mubr.f32.mxu0 0.0
  %1336 = vmatmul.mubr.f32.gmra.mxu0 %v1260
  %v1337 = vpop.f32.mrf.mxu0
  %v1338 = vadd.f32 0.0, %v1337
  %v1339 = vpop.f32.mrf.mxu0
  %1340 = vmatprep.mubr.f32.mxu0 0.0
  %1341 = vmatmul.mubr.f32.gmra.mxu0 %v1263
  %v1342 = vpop.f32.mrf.mxu0
  %v1343 = vadd.f32 0.0, %v1342
  %v1344 = vpop.f32.mrf.mxu0
  %1345 = vdwg.mxu0
  %v1347 = vsel %vm1084, %v311, 0
  %v1350 = vsel %vm1084, %v447, 0
  %v1353 = vsel %vm1084, %v627, 0
  %v1356 = vsel %vm1084, %v763, 0
  %1358 = vmatprep.subr.mxu0 0.0
  %1359 = vmatpush1.xpose.msra.mxu0 0.0
  %1360 = vmatprep.subr.mxu0 0.0
  %1361 = vmatpush1.xpose.msra.mxu0 0.0
  %1362 = vmatprep.subr.mxu0 0.0
  %1363 = vmatpush1.xpose.msra.mxu0 0.0
  %1364 = vmatprep.subr.mxu0 0.0
  %1365 = vmatpush1.xpose.msra.mxu0 0.0
  %1366 = vmatprep.subr.mxu0 0.0
  %1367 = vmatpush1.xpose.msra.mxu0 0.0
  %1368 = vmatprep.subr.mxu0 0.0
  %1369 = vmatpush1.xpose.msra.mxu0 0.0
  %1370 = vmatprep.subr.mxu0 0.0
  %1371 = vmatpush1.xpose.msra.mxu0 0.0
  %1372 = vmatprep.subr.mxu0 0.0
  %1373 = vmatpush1.xpose.msra.mxu0 0.0
  %1374 = vmatprep.subr.mxu0 0.0
  %1375 = vmatpush1.xpose.msra.mxu0 0.0
  %1376 = vmatprep.subr.mxu0 0.0
  %1377 = vmatpush1.xpose.msra.mxu0 0.0
  %1378 = vmatprep.subr.mxu0 0.0
  %1379 = vmatpush1.xpose.msra.mxu0 0.0
  %1380 = vmatprep.subr.mxu0 0.0
  %1381 = vmatpush1.xpose.msra.mxu0 0.0
  %1382 = vmatprep.subr.mxu0 0.0
  %1383 = vmatpush1.xpose.msra.mxu0 0.0
  %1384 = vmatprep.subr.mxu0 0.0
  %1385 = vmatpush1.xpose.msra.mxu0 0.0
  %1386 = vmatprep.subr.mxu0 0.0
  %1387 = vmatpush1.xpose.msra.mxu0 %v1356
  %1388 = vmatprep.subr.mxu0 0.0
  %1389 = vmatpush1.xpose.msra.mxu0 %v1353
  %1390 = vmatprep.subr.mxu0 0.0
  %1391 = vmatpush2.xpose.msra.mxu0 0.0
  %1392 = vmatprep.subr.mxu0 0.0
  %1393 = vmatpush2.xpose.msra.mxu0 0.0
  %1394 = vmatprep.subr.mxu0 0.0
  %1395 = vmatpush2.xpose.msra.mxu0 0.0
  %1396 = vmatprep.subr.mxu0 0.0
  %1397 = vmatpush2.xpose.msra.mxu0 0.0
  %1398 = vmatprep.subr.mxu0 0.0
  %1399 = vmatpush2.xpose.msra.mxu0 0.0
  %1400 = vmatprep.subr.mxu0 0.0
  %1401 = vmatpush2.xpose.msra.mxu0 0.0
  %1402 = vmatprep.subr.mxu0 0.0
  %1403 = vmatpush2.xpose.msra.mxu0 0.0
  %1404 = vmatprep.subr.mxu0 0.0
  %1405 = vmatpush2.xpose.msra.mxu0 0.0
  %1406 = vmatprep.subr.mxu0 0.0
  %1407 = vmatpush2.xpose.msra.mxu0 0.0
  %1408 = vmatprep.subr.mxu0 0.0
  %1409 = vmatpush2.xpose.msra.mxu0 0.0
  %1410 = vmatprep.subr.mxu0 0.0
  %1411 = vmatpush2.xpose.msra.mxu0 0.0
  %1412 = vmatprep.subr.mxu0 0.0
  %1413 = vmatpush2.xpose.msra.mxu0 0.0
  %1414 = vmatprep.subr.mxu0 0.0
  %1415 = vmatpush2.xpose.msra.mxu0 0.0
  %1416 = vmatprep.subr.mxu0 0.0
  %1417 = vmatpush2.xpose.msra.mxu0 0.0
  %1418 = vmatprep.subr.mxu0 0.0
  %1419 = vmatpush2.xpose.msra.mxu0 0.0
  %1420 = vmatprep.subr.mxu0 0.0
  %1421 = vmatpush2.xpose.msra.mxu0 0.0
  %1422 = vmatprep.mubr.f32.mxu0 0.0
  %1423 = vmatmul.mubr.f32.gmra.mxu0 %v1347
  %v1424 = vpop.f32.mrf.mxu0
  %v1425 = vadd.f32 0.0, %v1424
  %v1426 = vpop.f32.mrf.mxu0
  %1427 = vmatprep.mubr.f32.mxu0 0.0
  %1428 = vmatmul.mubr.f32.gmra.mxu0 %v1350
  %v1429 = vpop.f32.mrf.mxu0
  %v1430 = vadd.f32 0.0, %v1429
  %v1431 = vpop.f32.mrf.mxu0
  %1432 = vdwg.mxu0
  %v1434 = vsel %vm1084, %v312, 0
  %v1437 = vsel %vm1084, %v448, 0
  %v1440 = vsel %vm1084, %v628, 0
  %v1443 = vsel %vm1084, %v764, 0
  %1445 = vmatprep.subr.mxu0 0.0
  %1446 = vmatpush1.xpose.msra.mxu0 0.0
  %1447 = vmatprep.subr.mxu0 0.0
  %1448 = vmatpush1.xpose.msra.mxu0 0.0
  %1449 = vmatprep.subr.mxu0 0.0
  %1450 = vmatpush1.xpose.msra.mxu0 0.0
  %1451 = vmatprep.subr.mxu0 0.0
  %1452 = vmatpush1.xpose.msra.mxu0 0.0
  %1453 = vmatprep.subr.mxu0 0.0
  %1454 = vmatpush1.xpose.msra.mxu0 0.0
  %1455 = vmatprep.subr.mxu0 0.0
  %1456 = vmatpush1.xpose.msra.mxu0 0.0
  %1457 = vmatprep.subr.mxu0 0.0
  %1458 = vmatpush1.xpose.msra.mxu0 0.0
  %1459 = vmatprep.subr.mxu0 0.0
  %1460 = vmatpush1.xpose.msra.mxu0 0.0
  %1461 = vmatprep.subr.mxu0 0.0
  %1462 = vmatpush1.xpose.msra.mxu0 0.0
  %1463 = vmatprep.subr.mxu0 0.0
  %1464 = vmatpush1.xpose.msra.mxu0 0.0
  %1465 = vmatprep.subr.mxu0 0.0
  %1466 = vmatpush1.xpose.msra.mxu0 0.0
  %1467 = vmatprep.subr.mxu0 0.0
  %1468 = vmatpush1.xpose.msra.mxu0 0.0
  %1469 = vmatprep.subr.mxu0 0.0
  %1470 = vmatpush1.xpose.msra.mxu0 0.0
  %1471 = vmatprep.subr.mxu0 0.0
  %1472 = vmatpush1.xpose.msra.mxu0 0.0
  %1473 = vmatprep.subr.mxu0 0.0
  %1474 = vmatpush1.xpose.msra.mxu0 %v1443
  %1475 = vmatprep.subr.mxu0 0.0
  %1476 = vmatpush1.xpose.msra.mxu0 %v1440
  %1477 = vmatprep.subr.mxu0 0.0
  %1478 = vmatpush2.xpose.msra.mxu0 0.0
  %1479 = vmatprep.subr.mxu0 0.0
  %1480 = vmatpush2.xpose.msra.mxu0 0.0
  %1481 = vmatprep.subr.mxu0 0.0
  %1482 = vmatpush2.xpose.msra.mxu0 0.0
  %1483 = vmatprep.subr.mxu0 0.0
  %1484 = vmatpush2.xpose.msra.mxu0 0.0
  %1485 = vmatprep.subr.mxu0 0.0
  %1486 = vmatpush2.xpose.msra.mxu0 0.0
  %1487 = vmatprep.subr.mxu0 0.0
  %1488 = vmatpush2.xpose.msra.mxu0 0.0
  %1489 = vmatprep.subr.mxu0 0.0
  %1490 = vmatpush2.xpose.msra.mxu0 0.0
  %1491 = vmatprep.subr.mxu0 0.0
  %1492 = vmatpush2.xpose.msra.mxu0 0.0
  %1493 = vmatprep.subr.mxu0 0.0
  %1494 = vmatpush2.xpose.msra.mxu0 0.0
  %1495 = vmatprep.subr.mxu0 0.0
  %1496 = vmatpush2.xpose.msra.mxu0 0.0
  %1497 = vmatprep.subr.mxu0 0.0
  %1498 = vmatpush2.xpose.msra.mxu0 0.0
  %1499 = vmatprep.subr.mxu0 0.0
  %1500 = vmatpush2.xpose.msra.mxu0 0.0
  %1501 = vmatprep.subr.mxu0 0.0
  %1502 = vmatpush2.xpose.msra.mxu0 0.0
  %1503 = vmatprep.subr.mxu0 0.0
  %1504 = vmatpush2.xpose.msra.mxu0 0.0
  %1505 = vmatprep.subr.mxu0 0.0
  %1506 = vmatpush2.xpose.msra.mxu0 0.0
  %1507 = vmatprep.subr.mxu0 0.0
  %1508 = vmatpush2.xpose.msra.mxu0 0.0
  %1509 = vmatprep.mubr.f32.mxu0 0.0
  %1510 = vmatmul.mubr.f32.gmra.mxu0 %v1434
  %v1511 = vpop.f32.mrf.mxu0
  %v1512 = vadd.f32 0.0, %v1511
  %v1513 = vpop.f32.mrf.mxu0
  %1514 = vmatprep.mubr.f32.mxu0 0.0
  %1515 = vmatmul.mubr.f32.gmra.mxu0 %v1437
  %v1516 = vpop.f32.mrf.mxu0
  %v1517 = vadd.f32 0.0, %v1516
  %v1518 = vpop.f32.mrf.mxu0
  %1519 = vdwg.mxu0
  %v1521 = vsel %vm1084, %v313, 0
  %v1524 = vsel %vm1084, %v449, 0
  %v1527 = vsel %vm1084, %v629, 0
  %v1530 = vsel %vm1084, %v765, 0
  %1532 = vmatprep.subr.mxu0 0.0
  %1533 = vmatpush1.xpose.msra.mxu0 0.0
  %1534 = vmatprep.subr.mxu0 0.0
  %1535 = vmatpush1.xpose.msra.mxu0 0.0
  %1536 = vmatprep.subr.mxu0 0.0
  %1537 = vmatpush1.xpose.msra.mxu0 0.0
  %1538 = vmatprep.subr.mxu0 0.0
  %1539 = vmatpush1.xpose.msra.mxu0 0.0
  %1540 = vmatprep.subr.mxu0 0.0
  %1541 = vmatpush1.xpose.msra.mxu0 0.0
  %1542 = vmatprep.subr.mxu0 0.0
  %1543 = vmatpush1.xpose.msra.mxu0 0.0
  %1544 = vmatprep.subr.mxu0 0.0
  %1545 = vmatpush1.xpose.msra.mxu0 0.0
  %1546 = vmatprep.subr.mxu0 0.0
  %1547 = vmatpush1.xpose.msra.mxu0 0.0
  %1548 = vmatprep.subr.mxu0 0.0
  %1549 = vmatpush1.xpose.msra.mxu0 0.0
  %1550 = vmatprep.subr.mxu0 0.0
  %1551 = vmatpush1.xpose.msra.mxu0 0.0
  %1552 = vmatprep.subr.mxu0 0.0
  %1553 = vmatpush1.xpose.msra.mxu0 0.0
  %1554 = vmatprep.subr.mxu0 0.0
  %1555 = vmatpush1.xpose.msra.mxu0 0.0
  %1556 = vmatprep.subr.mxu0 0.0
  %1557 = vmatpush1.xpose.msra.mxu0 0.0
  %1558 = vmatprep.subr.mxu0 0.0
  %1559 = vmatpush1.xpose.msra.mxu0 0.0
  %1560 = vmatprep.subr.mxu0 0.0
  %1561 = vmatpush1.xpose.msra.mxu0 %v1530
  %1562 = vmatprep.subr.mxu0 0.0
  %1563 = vmatpush1.xpose.msra.mxu0 %v1527
  %1564 = vmatprep.subr.mxu0 0.0
  %1565 = vmatpush2.xpose.msra.mxu0 0.0
  %1566 = vmatprep.subr.mxu0 0.0
  %1567 = vmatpush2.xpose.msra.mxu0 0.0
  %1568 = vmatprep.subr.mxu0 0.0
  %1569 = vmatpush2.xpose.msra.mxu0 0.0
  %1570 = vmatprep.subr.mxu0 0.0
  %1571 = vmatpush2.xpose.msra.mxu0 0.0
  %1572 = vmatprep.subr.mxu0 0.0
  %1573 = vmatpush2.xpose.msra.mxu0 0.0
  %1574 = vmatprep.subr.mxu0 0.0
  %1575 = vmatpush2.xpose.msra.mxu0 0.0
  %1576 = vmatprep.subr.mxu0 0.0
  %1577 = vmatpush2.xpose.msra.mxu0 0.0
  %1578 = vmatprep.subr.mxu0 0.0
  %1579 = vmatpush2.xpose.msra.mxu0 0.0
  %1580 = vmatprep.subr.mxu0 0.0
  %1581 = vmatpush2.xpose.msra.mxu0 0.0
  %1582 = vmatprep.subr.mxu0 0.0
  %1583 = vmatpush2.xpose.msra.mxu0 0.0
  %1584 = vmatprep.subr.mxu0 0.0
  %1585 = vmatpush2.xpose.msra.mxu0 0.0
  %1586 = vmatprep.subr.mxu0 0.0
  %1587 = vmatpush2.xpose.msra.mxu0 0.0
  %1588 = vmatprep.subr.mxu0 0.0
  %1589 = vmatpush2.xpose.msra.mxu0 0.0
  %1590 = vmatprep.subr.mxu0 0.0
  %1591 = vmatpush2.xpose.msra.mxu0 0.0
  %1592 = vmatprep.subr.mxu0 0.0
  %1593 = vmatpush2.xpose.msra.mxu0 0.0
  %1594 = vmatprep.subr.mxu0 0.0
  %1595 = vmatpush2.xpose.msra.mxu0 0.0
  %1596 = vmatprep.mubr.f32.mxu0 0.0
  %1597 = vmatmul.mubr.f32.gmra.mxu0 %v1521
  %v1598 = vpop.f32.mrf.mxu0
  %v1599 = vadd.f32 0.0, %v1598
  %v1600 = vpop.f32.mrf.mxu0
  %1601 = vmatprep.mubr.f32.mxu0 0.0
  %1602 = vmatmul.mubr.f32.gmra.mxu0 %v1524
  %v1603 = vpop.f32.mrf.mxu0
  %v1604 = vadd.f32 0.0, %v1603
  %v1605 = vpop.f32.mrf.mxu0
  %1606 = vdwg.mxu0
  %v1608 = vsel %vm1084, %v314, 0
  %v1611 = vsel %vm1084, %v450, 0
  %v1614 = vsel %vm1084, %v630, 0
  %v1617 = vsel %vm1084, %v766, 0
  %1619 = vmatprep.subr.mxu0 0.0
  %1620 = vmatpush1.xpose.msra.mxu0 0.0
  %1621 = vmatprep.subr.mxu0 0.0
  %1622 = vmatpush1.xpose.msra.mxu0 0.0
  %1623 = vmatprep.subr.mxu0 0.0
  %1624 = vmatpush1.xpose.msra.mxu0 0.0
  %1625 = vmatprep.subr.mxu0 0.0
  %1626 = vmatpush1.xpose.msra.mxu0 0.0
  %1627 = vmatprep.subr.mxu0 0.0
  %1628 = vmatpush1.xpose.msra.mxu0 0.0
  %1629 = vmatprep.subr.mxu0 0.0
  %1630 = vmatpush1.xpose.msra.mxu0 0.0
  %1631 = vmatprep.subr.mxu0 0.0
  %1632 = vmatpush1.xpose.msra.mxu0 0.0
  %1633 = vmatprep.subr.mxu0 0.0
  %1634 = vmatpush1.xpose.msra.mxu0 0.0
  %1635 = vmatprep.subr.mxu0 0.0
  %1636 = vmatpush1.xpose.msra.mxu0 0.0
  %1637 = vmatprep.subr.mxu0 0.0
  %1638 = vmatpush1.xpose.msra.mxu0 0.0
  %1639 = vmatprep.subr.mxu0 0.0
  %1640 = vmatpush1.xpose.msra.mxu0 0.0
  %1641 = vmatprep.subr.mxu0 0.0
  %1642 = vmatpush1.xpose.msra.mxu0 0.0
  %1643 = vmatprep.subr.mxu0 0.0
  %1644 = vmatpush1.xpose.msra.mxu0 0.0
  %1645 = vmatprep.subr.mxu0 0.0
  %1646 = vmatpush1.xpose.msra.mxu0 0.0
  %1647 = vmatprep.subr.mxu0 0.0
  %1648 = vmatpush1.xpose.msra.mxu0 %v1617
  %1649 = vmatprep.subr.mxu0 0.0
  %1650 = vmatpush1.xpose.msra.mxu0 %v1614
  %1651 = vmatprep.subr.mxu0 0.0
  %1652 = vmatpush2.xpose.msra.mxu0 0.0
  %1653 = vmatprep.subr.mxu0 0.0
  %1654 = vmatpush2.xpose.msra.mxu0 0.0
  %1655 = vmatprep.subr.mxu0 0.0
  %1656 = vmatpush2.xpose.msra.mxu0 0.0
  %1657 = vmatprep.subr.mxu0 0.0
  %1658 = vmatpush2.xpose.msra.mxu0 0.0
  %1659 = vmatprep.subr.mxu0 0.0
  %1660 = vmatpush2.xpose.msra.mxu0 0.0
  %1661 = vmatprep.subr.mxu0 0.0
  %1662 = vmatpush2.xpose.msra.mxu0 0.0
  %1663 = vmatprep.subr.mxu0 0.0
  %1664 = vmatpush2.xpose.msra.mxu0 0.0
  %1665 = vmatprep.subr.mxu0 0.0
  %1666 = vmatpush2.xpose.msra.mxu0 0.0
  %1667 = vmatprep.subr.mxu0 0.0
  %1668 = vmatpush2.xpose.msra.mxu0 0.0
  %1669 = vmatprep.subr.mxu0 0.0
  %1670 = vmatpush2.xpose.msra.mxu0 0.0
  %1671 = vmatprep.subr.mxu0 0.0
  %1672 = vmatpush2.xpose.msra.mxu0 0.0
  %1673 = vmatprep.subr.mxu0 0.0
  %1674 = vmatpush2.xpose.msra.mxu0 0.0
  %1675 = vmatprep.subr.mxu0 0.0
  %1676 = vmatpush2.xpose.msra.mxu0 0.0
  %1677 = vmatprep.subr.mxu0 0.0
  %1678 = vmatpush2.xpose.msra.mxu0 0.0
  %1679 = vmatprep.subr.mxu0 0.0
  %1680 = vmatpush2.xpose.msra.mxu0 0.0
  %1681 = vmatprep.subr.mxu0 0.0
  %1682 = vmatpush2.xpose.msra.mxu0 0.0
  %1683 = vmatprep.mubr.f32.mxu0 0.0
  %1684 = vmatmul.mubr.f32.gmra.mxu0 %v1608
  %v1685 = vpop.f32.mrf.mxu0
  %v1686 = vadd.f32 0.0, %v1685
  %v1687 = vpop.f32.mrf.mxu0
  %1688 = vmatprep.mubr.f32.mxu0 0.0
  %1689 = vmatmul.mubr.f32.gmra.mxu0 %v1611
  %v1690 = vpop.f32.mrf.mxu0
  %v1691 = vadd.f32 0.0, %v1690
  %v1692 = vpop.f32.mrf.mxu0
  %1693 = vdwg.mxu0
  %v1695 = vsel %vm1084, %v315, 0
  %v1698 = vsel %vm1084, %v451, 0
  %v1701 = vsel %vm1084, %v631, 0
  %v1704 = vsel %vm1084, %v767, 0
  %1706 = vmatprep.subr.mxu0 0.0
  %1707 = vmatpush1.xpose.msra.mxu0 0.0
  %1708 = vmatprep.subr.mxu0 0.0
  %1709 = vmatpush1.xpose.msra.mxu0 0.0
  %1710 = vmatprep.subr.mxu0 0.0
  %1711 = vmatpush1.xpose.msra.mxu0 0.0
  %1712 = vmatprep.subr.mxu0 0.0
  %1713 = vmatpush1.xpose.msra.mxu0 0.0
  %1714 = vmatprep.subr.mxu0 0.0
  %1715 = vmatpush1.xpose.msra.mxu0 0.0
  %1716 = vmatprep.subr.mxu0 0.0
  %1717 = vmatpush1.xpose.msra.mxu0 0.0
  %1718 = vmatprep.subr.mxu0 0.0
  %1719 = vmatpush1.xpose.msra.mxu0 0.0
  %1720 = vmatprep.subr.mxu0 0.0
  %1721 = vmatpush1.xpose.msra.mxu0 0.0
  %1722 = vmatprep.subr.mxu0 0.0
  %1723 = vmatpush1.xpose.msra.mxu0 0.0
  %1724 = vmatprep.subr.mxu0 0.0
  %1725 = vmatpush1.xpose.msra.mxu0 0.0
  %1726 = vmatprep.subr.mxu0 0.0
  %1727 = vmatpush1.xpose.msra.mxu0 0.0
  %1728 = vmatprep.subr.mxu0 0.0
  %1729 = vmatpush1.xpose.msra.mxu0 0.0
  %1730 = vmatprep.subr.mxu0 0.0
  %1731 = vmatpush1.xpose.msra.mxu0 0.0
  %1732 = vmatprep.subr.mxu0 0.0
  %1733 = vmatpush1.xpose.msra.mxu0 0.0
  %1734 = vmatprep.subr.mxu0 0.0
  %1735 = vmatpush1.xpose.msra.mxu0 %v1704
  %1736 = vmatprep.subr.mxu0 0.0
  %1737 = vmatpush1.xpose.msra.mxu0 %v1701
  %1738 = vmatprep.subr.mxu0 0.0
  %1739 = vmatpush2.xpose.msra.mxu0 0.0
  %1740 = vmatprep.subr.mxu0 0.0
  %1741 = vmatpush2.xpose.msra.mxu0 0.0
  %1742 = vmatprep.subr.mxu0 0.0
  %1743 = vmatpush2.xpose.msra.mxu0 0.0
  %1744 = vmatprep.subr.mxu0 0.0
  %1745 = vmatpush2.xpose.msra.mxu0 0.0
  %1746 = vmatprep.subr.mxu0 0.0
  %1747 = vmatpush2.xpose.msra.mxu0 0.0
  %1748 = vmatprep.subr.mxu0 0.0
  %1749 = vmatpush2.xpose.msra.mxu0 0.0
  %1750 = vmatprep.subr.mxu0 0.0
  %1751 = vmatpush2.xpose.msra.mxu0 0.0
  %1752 = vmatprep.subr.mxu0 0.0
  %1753 = vmatpush2.xpose.msra.mxu0 0.0
  %1754 = vmatprep.subr.mxu0 0.0
  %1755 = vmatpush2.xpose.msra.mxu0 0.0
  %1756 = vmatprep.subr.mxu0 0.0
  %1757 = vmatpush2.xpose.msra.mxu0 0.0
  %1758 = vmatprep.subr.mxu0 0.0
  %1759 = vmatpush2.xpose.msra.mxu0 0.0
  %1760 = vmatprep.subr.mxu0 0.0
  %1761 = vmatpush2.xpose.msra.mxu0 0.0
  %1762 = vmatprep.subr.mxu0 0.0
  %1763 = vmatpush2.xpose.msra.mxu0 0.0
  %1764 = vmatprep.subr.mxu0 0.0
  %1765 = vmatpush2.xpose.msra.mxu0 0.0
  %1766 = vmatprep.subr.mxu0 0.0
  %1767 = vmatpush2.xpose.msra.mxu0 0.0
  %1768 = vmatprep.subr.mxu0 0.0
  %1769 = vmatpush2.xpose.msra.mxu0 0.0
  %1770 = vmatprep.mubr.f32.mxu0 0.0
  %1771 = vmatmul.mubr.f32.gmra.mxu0 %v1695
  %v1772 = vpop.f32.mrf.mxu0
  %v1773 = vadd.f32 0.0, %v1772
  %v1774 = vpop.f32.mrf.mxu0
  %1775 = vmatprep.mubr.f32.mxu0 0.0
  %1776 = vmatmul.mubr.f32.gmra.mxu0 %v1698
  %v1777 = vpop.f32.mrf.mxu0
  %v1778 = vadd.f32 0.0, %v1777
  %v1779 = vpop.f32.mrf.mxu0
  %1780 = vdwg.mxu0
  %v1781 = vmul.f32 %v1164, 0.25
  %v1782 = vmul.f32 %v1169, 0.25
  %v1783 = vmul.f32 %v1251, 0.25
  %v1784 = vmul.f32 %v1256, 0.25
  %v1785 = vmul.f32 %v1338, 0.25
  %v1786 = vmul.f32 %v1343, 0.25
  %v1787 = vmul.f32 %v1425, 0.25
  %v1788 = vmul.f32 %v1430, 0.25
  %v1789 = vmul.f32 %v1512, 0.25
  %v1790 = vmul.f32 %v1517, 0.25
  %v1791 = vmul.f32 %v1599, 0.25
  %v1792 = vmul.f32 %v1604, 0.25
  %v1793 = vmul.f32 %v1686, 0.25
  %v1794 = vmul.f32 %v1691, 0.25
  %v1795 = vmul.f32 %v1773, 0.25
  %v1796 = vmul.f32 %v1778, 0.25
  %v1797 = vsel %vm1084, %v1781, -inf
  %1798 = vmax.xlane.f32.xlu0 %v1797
  %v1799 = vpop.xlane.xlu0 %1798
  %v1800 = vsel %vm1084, %v1782, -inf
  %1801 = vmax.xlane.f32.xlu0 %v1800
  %v1802 = vpop.xlane.xlu0 %1801
  %v1803 = vsel %vm1084, %v1783, -inf
  %1804 = vmax.xlane.f32.xlu0 %v1803
  %v1805 = vpop.xlane.xlu0 %1804
  %v1806 = vsel %vm1084, %v1784, -inf
  %1807 = vmax.xlane.f32.xlu0 %v1806
  %v1808 = vpop.xlane.xlu0 %1807
  %v1809 = vsel %vm1084, %v1785, -inf
  %1810 = vmax.xlane.f32.xlu0 %v1809
  %v1811 = vpop.xlane.xlu0 %1810
  %v1812 = vsel %vm1084, %v1786, -inf
  %1813 = vmax.xlane.f32.xlu0 %v1812
  %v1814 = vpop.xlane.xlu0 %1813
  %v1815 = vsel %vm1084, %v1787, -inf
  %1816 = vmax.xlane.f32.xlu0 %v1815
  %v1817 = vpop.xlane.xlu0 %1816
  %v1818 = vsel %vm1084, %v1788, -inf
  %1819 = vmax.xlane.f32.xlu0 %v1818
  %v1820 = vpop.xlane.xlu0 %1819
  %v1821 = vsel %vm1084, %v1789, -inf
  %1822 = vmax.xlane.f32.xlu0 %v1821
  %v1823 = vpop.xlane.xlu0 %1822
  %v1824 = vsel %vm1084, %v1790, -inf
  %1825 = vmax.xlane.f32.xlu0 %v1824
  %v1826 = vpop.xlane.xlu0 %1825
  %v1827 = vsel %vm1084, %v1791, -inf
  %1828 = vmax.xlane.f32.xlu0 %v1827
  %v1829 = vpop.xlane.xlu0 %1828
  %v1830 = vsel %vm1084, %v1792, -inf
  %1831 = vmax.xlane.f32.xlu0 %v1830
  %v1832 = vpop.xlane.xlu0 %1831
  %v1833 = vsel %vm1084, %v1793, -inf
  %1834 = vmax.xlane.f32.xlu0 %v1833
  %v1835 = vpop.xlane.xlu0 %1834
  %v1836 = vsel %vm1084, %v1794, -inf
  %1837 = vmax.xlane.f32.xlu0 %v1836
  %v1838 = vpop.xlane.xlu0 %1837
  %v1839 = vsel %vm1084, %v1795, -inf
  %1840 = vmax.xlane.f32.xlu0 %v1839
  %v1841 = vpop.xlane.xlu0 %1840
  %v1842 = vsel %vm1084, %v1796, -inf
  %1843 = vmax.xlane.f32.xlu0 %v1842
  %v1844 = vpop.xlane.xlu0 %1843
  %v1845 = vsub.f32 %v1781, %v1799
  %v1846 = vsub.f32 %v1782, %v1802
  %v1847 = vsub.f32 %v1783, %v1805
  %v1848 = vsub.f32 %v1784, %v1808
  %v1849 = vsub.f32 %v1785, %v1811
  %v1850 = vsub.f32 %v1786, %v1814
  %v1851 = vsub.f32 %v1787, %v1817
  %v1852 = vsub.f32 %v1788, %v1820
  %v1853 = vsub.f32 %v1789, %v1823
  %v1854 = vsub.f32 %v1790, %v1826
  %v1855 = vsub.f32 %v1791, %v1829
  %v1856 = vsub.f32 %v1792, %v1832
  %v1857 = vsub.f32 %v1793, %v1835
  %v1858 = vsub.f32 %v1794, %v1838
  %v1859 = vsub.f32 %v1795, %v1841
  %v1860 = vsub.f32 %v1796, %v1844
  %v1861 = vmul.f32 %v1845, 1.442695
  %v1862 = vpow.pop %v1861
  %v1863 = vmul.f32 %v1846, 1.442695
  %v1864 = vpow.pop %v1863
  %v1865 = vmul.f32 %v1847, 1.442695
  %v1866 = vpow.pop %v1865
  %v1867 = vmul.f32 %v1848, 1.442695
  %v1868 = vpow.pop %v1867
  %v1869 = vmul.f32 %v1849, 1.442695
  %v1870 = vpow.pop %v1869
  %v1871 = vmul.f32 %v1850, 1.442695
  %v1872 = vpow.pop %v1871
  %v1873 = vmul.f32 %v1851, 1.442695
  %v1874 = vpow.pop %v1873
  %v1875 = vmul.f32 %v1852, 1.442695
  %v1876 = vpow.pop %v1875
  %v1877 = vmul.f32 %v1853, 1.442695
  %v1878 = vpow.pop %v1877
  %v1879 = vmul.f32 %v1854, 1.442695
  %v1880 = vpow.pop %v1879
  %v1881 = vmul.f32 %v1855, 1.442695
  %v1882 = vpow.pop %v1881
  %v1883 = vmul.f32 %v1856, 1.442695
  %v1884 = vpow.pop %v1883
  %v1885 = vmul.f32 %v1857, 1.442695
  %v1886 = vpow.pop %v1885
  %v1887 = vmul.f32 %v1858, 1.442695
  %v1888 = vpow.pop %v1887
  %v1889 = vmul.f32 %v1859, 1.442695
  %v1890 = vpow.pop %v1889
  %v1891 = vmul.f32 %v1860, 1.442695
  %v1892 = vpow.pop %v1891
  %v1893 = vsel %vm1084, %v1862, 0.0
  %1894 = vadd.xlane.f32.xlu0 %v1893
  %v1895 = vpop.xlane.xlu0 %1894
  %v1896 = vsel %vm1084, %v1864, 0.0
  %1897 = vadd.xlane.f32.xlu0 %v1896
  %v1898 = vpop.xlane.xlu0 %1897
  %v1899 = vsel %vm1084, %v1866, 0.0
  %1900 = vadd.xlane.f32.xlu0 %v1899
  %v1901 = vpop.xlane.xlu0 %1900
  %v1902 = vsel %vm1084, %v1868, 0.0
  %1903 = vadd.xlane.f32.xlu0 %v1902
  %v1904 = vpop.xlane.xlu0 %1903
  %v1905 = vsel %vm1084, %v1870, 0.0
  %1906 = vadd.xlane.f32.xlu0 %v1905
  %v1907 = vpop.xlane.xlu0 %1906
  %v1908 = vsel %vm1084, %v1872, 0.0
  %1909 = vadd.xlane.f32.xlu0 %v1908
  %v1910 = vpop.xlane.xlu0 %1909
  %v1911 = vsel %vm1084, %v1874, 0.0
  %1912 = vadd.xlane.f32.xlu0 %v1911
  %v1913 = vpop.xlane.xlu0 %1912
  %v1914 = vsel %vm1084, %v1876, 0.0
  %1915 = vadd.xlane.f32.xlu0 %v1914
  %v1916 = vpop.xlane.xlu0 %1915
  %v1917 = vsel %vm1084, %v1878, 0.0
  %1918 = vadd.xlane.f32.xlu0 %v1917
  %v1919 = vpop.xlane.xlu0 %1918
  %v1920 = vsel %vm1084, %v1880, 0.0
  %1921 = vadd.xlane.f32.xlu0 %v1920
  %v1922 = vpop.xlane.xlu0 %1921
  %v1923 = vsel %vm1084, %v1882, 0.0
  %1924 = vadd.xlane.f32.xlu0 %v1923
  %v1925 = vpop.xlane.xlu0 %1924
  %v1926 = vsel %vm1084, %v1884, 0.0
  %1927 = vadd.xlane.f32.xlu0 %v1926
  %v1928 = vpop.xlane.xlu0 %1927
  %v1929 = vsel %vm1084, %v1886, 0.0
  %1930 = vadd.xlane.f32.xlu0 %v1929
  %v1931 = vpop.xlane.xlu0 %1930
  %v1932 = vsel %vm1084, %v1888, 0.0
  %1933 = vadd.xlane.f32.xlu0 %v1932
  %v1934 = vpop.xlane.xlu0 %1933
  %v1935 = vsel %vm1084, %v1890, 0.0
  %1936 = vadd.xlane.f32.xlu0 %v1935
  %v1937 = vpop.xlane.xlu0 %1936
  %v1938 = vsel %vm1084, %v1892, 0.0
  %1939 = vadd.xlane.f32.xlu0 %v1938
  %v1940 = vpop.xlane.xlu0 %1939
  %v1941 = vrcp.pop %v1895
  %v1942 = vmul.f32 %v1862, %v1941
  %v1943 = vrcp.pop %v1898
  %v1944 = vmul.f32 %v1864, %v1943
  %v1945 = vrcp.pop %v1901
  %v1946 = vmul.f32 %v1866, %v1945
  %v1947 = vrcp.pop %v1904
  %v1948 = vmul.f32 %v1868, %v1947
  %v1949 = vrcp.pop %v1907
  %v1950 = vmul.f32 %v1870, %v1949
  %v1951 = vrcp.pop %v1910
  %v1952 = vmul.f32 %v1872, %v1951
  %v1953 = vrcp.pop %v1913
  %v1954 = vmul.f32 %v1874, %v1953
  %v1955 = vrcp.pop %v1916
  %v1956 = vmul.f32 %v1876, %v1955
  %v1957 = vrcp.pop %v1919
  %v1958 = vmul.f32 %v1878, %v1957
  %v1959 = vrcp.pop %v1922
  %v1960 = vmul.f32 %v1880, %v1959
  %v1961 = vrcp.pop %v1925
  %v1962 = vmul.f32 %v1882, %v1961
  %v1963 = vrcp.pop %v1928
  %v1964 = vmul.f32 %v1884, %v1963
  %v1965 = vrcp.pop %v1931
  %v1966 = vmul.f32 %v1886, %v1965
  %v1967 = vrcp.pop %v1934
  %v1968 = vmul.f32 %v1888, %v1967
  %v1969 = vrcp.pop %v1937
  %v1970 = vmul.f32 %v1890, %v1969
  %v1971 = vrcp.pop %v1940
  %v1972 = vmul.f32 %v1892, %v1971
  %v1974 = vsel %vm1084, %v1942, 0
  %v1977 = vsel %vm1084, %v1944, 0
  %1979 = vmatprep.subr.mxu0 0.0
  %1980 = vmatpush1.msra.mxu0 0.0
  %1981 = vmatprep.subr.mxu0 0.0
  %1982 = vmatpush1.msra.mxu0 0.0
  %1983 = vmatprep.subr.mxu0 0.0
  %1984 = vmatpush1.msra.mxu0 0.0
  %1985 = vmatprep.subr.mxu0 0.0
  %1986 = vmatpush1.msra.mxu0 0.0
  %1987 = vmatprep.subr.mxu0 0.0
  %1988 = vmatpush1.msra.mxu0 0.0
  %1989 = vmatprep.subr.mxu0 0.0
  %1990 = vmatpush1.msra.mxu0 0.0
  %1991 = vmatprep.subr.mxu0 0.0
  %1992 = vmatpush1.msra.mxu0 0.0
  %1993 = vmatprep.subr.mxu0 0.0
  %1994 = vmatpush1.msra.mxu0 0.0
  %1995 = vmatprep.subr.mxu0 0.0
  %1996 = vmatpush1.msra.mxu0 0.0
  %1997 = vmatprep.subr.mxu0 0.0
  %1998 = vmatpush1.msra.mxu0 0.0
  %1999 = vmatprep.subr.mxu0 0.0
  %2000 = vmatpush1.msra.mxu0 0.0
  %2001 = vmatprep.subr.mxu0 0.0
  %2002 = vmatpush1.msra.mxu0 0.0
  %2003 = vmatprep.subr.mxu0 0.0
  %2004 = vmatpush1.msra.mxu0 0.0
  %2005 = vmatprep.subr.mxu0 0.0
  %2006 = vmatpush1.msra.mxu0 0.0
  %2007 = vmatprep.subr.mxu0 0.0
  %2008 = vmatpush1.msra.mxu0 %v1076
  %2009 = vmatprep.subr.mxu0 0.0
  %2010 = vmatpush1.msra.mxu0 %v940
  %2011 = vmatprep.subr.mxu0 0.0
  %2012 = vmatpush2.msra.mxu0 0.0
  %2013 = vmatprep.subr.mxu0 0.0
  %2014 = vmatpush2.msra.mxu0 0.0
  %2015 = vmatprep.subr.mxu0 0.0
  %2016 = vmatpush2.msra.mxu0 0.0
  %2017 = vmatprep.subr.mxu0 0.0
  %2018 = vmatpush2.msra.mxu0 0.0
  %2019 = vmatprep.subr.mxu0 0.0
  %2020 = vmatpush2.msra.mxu0 0.0
  %2021 = vmatprep.subr.mxu0 0.0
  %2022 = vmatpush2.msra.mxu0 0.0
  %2023 = vmatprep.subr.mxu0 0.0
  %2024 = vmatpush2.msra.mxu0 0.0
  %2025 = vmatprep.subr.mxu0 0.0
  %2026 = vmatpush2.msra.mxu0 0.0
  %2027 = vmatprep.subr.mxu0 0.0
  %2028 = vmatpush2.msra.mxu0 0.0
  %2029 = vmatprep.subr.mxu0 0.0
  %2030 = vmatpush2.msra.mxu0 0.0
  %2031 = vmatprep.subr.mxu0 0.0
  %2032 = vmatpush2.msra.mxu0 0.0
  %2033 = vmatprep.subr.mxu0 0.0
  %2034 = vmatpush2.msra.mxu0 0.0
  %2035 = vmatprep.subr.mxu0 0.0
  %2036 = vmatpush2.msra.mxu0 0.0
  %2037 = vmatprep.subr.mxu0 0.0
  %2038 = vmatpush2.msra.mxu0 0.0
  %2039 = vmatprep.subr.mxu0 0.0
  %2040 = vmatpush2.msra.mxu0 0.0
  %2041 = vmatprep.subr.mxu0 0.0
  %2042 = vmatpush2.msra.mxu0 0.0
  %2043 = vmatprep.mubr.f32.mxu0 0.0
  %2044 = vmatmul.mubr.f32.gmra.mxu0 %v1974
  %v2045 = vpop.f32.mrf.mxu0
  %v2046 = vadd.f32 0.0, %v2045
  %v2047 = vpop.f32.mrf.mxu0
  %2048 = vmatprep.mubr.f32.mxu0 0.0
  %2049 = vmatmul.mubr.f32.gmra.mxu0 %v1977
  %v2050 = vpop.f32.mrf.mxu0
  %v2051 = vadd.f32 0.0, %v2050
  %v2052 = vpop.f32.mrf.mxu0
  %2053 = vdwg.mxu0
  %v2055 = vsel %vm1084, %v1946, 0
  %v2058 = vsel %vm1084, %v1948, 0
  %2060 = vmatprep.subr.mxu0 0.0
  %2061 = vmatpush1.msra.mxu0 0.0
  %2062 = vmatprep.subr.mxu0 0.0
  %2063 = vmatpush1.msra.mxu0 0.0
  %2064 = vmatprep.subr.mxu0 0.0
  %2065 = vmatpush1.msra.mxu0 0.0
  %2066 = vmatprep.subr.mxu0 0.0
  %2067 = vmatpush1.msra.mxu0 0.0
  %2068 = vmatprep.subr.mxu0 0.0
  %2069 = vmatpush1.msra.mxu0 0.0
  %2070 = vmatprep.subr.mxu0 0.0
  %2071 = vmatpush1.msra.mxu0 0.0
  %2072 = vmatprep.subr.mxu0 0.0
  %2073 = vmatpush1.msra.mxu0 0.0
  %2074 = vmatprep.subr.mxu0 0.0
  %2075 = vmatpush1.msra.mxu0 0.0
  %2076 = vmatprep.subr.mxu0 0.0
  %2077 = vmatpush1.msra.mxu0 0.0
  %2078 = vmatprep.subr.mxu0 0.0
  %2079 = vmatpush1.msra.mxu0 0.0
  %2080 = vmatprep.subr.mxu0 0.0
  %2081 = vmatpush1.msra.mxu0 0.0
  %2082 = vmatprep.subr.mxu0 0.0
  %2083 = vmatpush1.msra.mxu0 0.0
  %2084 = vmatprep.subr.mxu0 0.0
  %2085 = vmatpush1.msra.mxu0 0.0
  %2086 = vmatprep.subr.mxu0 0.0
  %2087 = vmatpush1.msra.mxu0 0.0
  %2088 = vmatprep.subr.mxu0 0.0
  %2089 = vmatpush1.msra.mxu0 %v1077
  %2090 = vmatprep.subr.mxu0 0.0
  %2091 = vmatpush1.msra.mxu0 %v941
  %2092 = vmatprep.subr.mxu0 0.0
  %2093 = vmatpush2.msra.mxu0 0.0
  %2094 = vmatprep.subr.mxu0 0.0
  %2095 = vmatpush2.msra.mxu0 0.0
  %2096 = vmatprep.subr.mxu0 0.0
  %2097 = vmatpush2.msra.mxu0 0.0
  %2098 = vmatprep.subr.mxu0 0.0
  %2099 = vmatpush2.msra.mxu0 0.0
  %2100 = vmatprep.subr.mxu0 0.0
  %2101 = vmatpush2.msra.mxu0 0.0
  %2102 = vmatprep.subr.mxu0 0.0
  %2103 = vmatpush2.msra.mxu0 0.0
  %2104 = vmatprep.subr.mxu0 0.0
  %2105 = vmatpush2.msra.mxu0 0.0
  %2106 = vmatprep.subr.mxu0 0.0
  %2107 = vmatpush2.msra.mxu0 0.0
  %2108 = vmatprep.subr.mxu0 0.0
  %2109 = vmatpush2.msra.mxu0 0.0
  %2110 = vmatprep.subr.mxu0 0.0
  %2111 = vmatpush2.msra.mxu0 0.0
  %2112 = vmatprep.subr.mxu0 0.0
  %2113 = vmatpush2.msra.mxu0 0.0
  %2114 = vmatprep.subr.mxu0 0.0
  %2115 = vmatpush2.msra.mxu0 0.0
  %2116 = vmatprep.subr.mxu0 0.0
  %2117 = vmatpush2.msra.mxu0 0.0
  %2118 = vmatprep.subr.mxu0 0.0
  %2119 = vmatpush2.msra.mxu0 0.0
  %2120 = vmatprep.subr.mxu0 0.0
  %2121 = vmatpush2.msra.mxu0 0.0
  %2122 = vmatprep.subr.mxu0 0.0
  %2123 = vmatpush2.msra.mxu0 0.0
  %2124 = vmatprep.mubr.f32.mxu0 0.0
  %2125 = vmatmul.mubr.f32.gmra.mxu0 %v2055
  %v2126 = vpop.f32.mrf.mxu0
  %v2127 = vadd.f32 0.0, %v2126
  %v2128 = vpop.f32.mrf.mxu0
  %2129 = vmatprep.mubr.f32.mxu0 0.0
  %2130 = vmatmul.mubr.f32.gmra.mxu0 %v2058
  %v2131 = vpop.f32.mrf.mxu0
  %v2132 = vadd.f32 0.0, %v2131
  %v2133 = vpop.f32.mrf.mxu0
  %2134 = vdwg.mxu0
  %v2136 = vsel %vm1084, %v1950, 0
  %v2139 = vsel %vm1084, %v1952, 0
  %2141 = vmatprep.subr.mxu0 0.0
  %2142 = vmatpush1.msra.mxu0 0.0
  %2143 = vmatprep.subr.mxu0 0.0
  %2144 = vmatpush1.msra.mxu0 0.0
  %2145 = vmatprep.subr.mxu0 0.0
  %2146 = vmatpush1.msra.mxu0 0.0
  %2147 = vmatprep.subr.mxu0 0.0
  %2148 = vmatpush1.msra.mxu0 0.0
  %2149 = vmatprep.subr.mxu0 0.0
  %2150 = vmatpush1.msra.mxu0 0.0
  %2151 = vmatprep.subr.mxu0 0.0
  %2152 = vmatpush1.msra.mxu0 0.0
  %2153 = vmatprep.subr.mxu0 0.0
  %2154 = vmatpush1.msra.mxu0 0.0
  %2155 = vmatprep.subr.mxu0 0.0
  %2156 = vmatpush1.msra.mxu0 0.0
  %2157 = vmatprep.subr.mxu0 0.0
  %2158 = vmatpush1.msra.mxu0 0.0
  %2159 = vmatprep.subr.mxu0 0.0
  %2160 = vmatpush1.msra.mxu0 0.0
  %2161 = vmatprep.subr.mxu0 0.0
  %2162 = vmatpush1.msra.mxu0 0.0
  %2163 = vmatprep.subr.mxu0 0.0
  %2164 = vmatpush1.msra.mxu0 0.0
  %2165 = vmatprep.subr.mxu0 0.0
  %2166 = vmatpush1.msra.mxu0 0.0
  %2167 = vmatprep.subr.mxu0 0.0
  %2168 = vmatpush1.msra.mxu0 0.0
  %2169 = vmatprep.subr.mxu0 0.0
  %2170 = vmatpush1.msra.mxu0 %v1078
  %2171 = vmatprep.subr.mxu0 0.0
  %2172 = vmatpush1.msra.mxu0 %v942
  %2173 = vmatprep.subr.mxu0 0.0
  %2174 = vmatpush2.msra.mxu0 0.0
  %2175 = vmatprep.subr.mxu0 0.0
  %2176 = vmatpush2.msra.mxu0 0.0
  %2177 = vmatprep.subr.mxu0 0.0
  %2178 = vmatpush2.msra.mxu0 0.0
  %2179 = vmatprep.subr.mxu0 0.0
  %2180 = vmatpush2.msra.mxu0 0.0
  %2181 = vmatprep.subr.mxu0 0.0
  %2182 = vmatpush2.msra.mxu0 0.0
  %2183 = vmatprep.subr.mxu0 0.0
  %2184 = vmatpush2.msra.mxu0 0.0
  %2185 = vmatprep.subr.mxu0 0.0
  %2186 = vmatpush2.msra.mxu0 0.0
  %2187 = vmatprep.subr.mxu0 0.0
  %2188 = vmatpush2.msra.mxu0 0.0
  %2189 = vmatprep.subr.mxu0 0.0
  %2190 = vmatpush2.msra.mxu0 0.0
  %2191 = vmatprep.subr.mxu0 0.0
  %2192 = vmatpush2.msra.mxu0 0.0
  %2193 = vmatprep.subr.mxu0 0.0
  %2194 = vmatpush2.msra.mxu0 0.0
  %2195 = vmatprep.subr.mxu0 0.0
  %2196 = vmatpush2.msra.mxu0 0.0
  %2197 = vmatprep.subr.mxu0 0.0
  %2198 = vmatpush2.msra.mxu0 0.0
  %2199 = vmatprep.subr.mxu0 0.0
  %2200 = vmatpush2.msra.mxu0 0.0
  %2201 = vmatprep.subr.mxu0 0.0
  %2202 = vmatpush2.msra.mxu0 0.0
  %2203 = vmatprep.subr.mxu0 0.0
  %2204 = vmatpush2.msra.mxu0 0.0
  %2205 = vmatprep.mubr.f32.mxu0 0.0
  %2206 = vmatmul.mubr.f32.gmra.mxu0 %v2136
  %v2207 = vpop.f32.mrf.mxu0
  %v2208 = vadd.f32 0.0, %v2207
  %v2209 = vpop.f32.mrf.mxu0
  %2210 = vmatprep.mubr.f32.mxu0 0.0
  %2211 = vmatmul.mubr.f32.gmra.mxu0 %v2139
  %v2212 = vpop.f32.mrf.mxu0
  %v2213 = vadd.f32 0.0, %v2212
  %v2214 = vpop.f32.mrf.mxu0
  %2215 = vdwg.mxu0
  %v2217 = vsel %vm1084, %v1954, 0
  %v2220 = vsel %vm1084, %v1956, 0
  %2222 = vmatprep.subr.mxu0 0.0
  %2223 = vmatpush1.msra.mxu0 0.0
  %2224 = vmatprep.subr.mxu0 0.0
  %2225 = vmatpush1.msra.mxu0 0.0
  %2226 = vmatprep.subr.mxu0 0.0
  %2227 = vmatpush1.msra.mxu0 0.0
  %2228 = vmatprep.subr.mxu0 0.0
  %2229 = vmatpush1.msra.mxu0 0.0
  %2230 = vmatprep.subr.mxu0 0.0
  %2231 = vmatpush1.msra.mxu0 0.0
  %2232 = vmatprep.subr.mxu0 0.0
  %2233 = vmatpush1.msra.mxu0 0.0
  %2234 = vmatprep.subr.mxu0 0.0
  %2235 = vmatpush1.msra.mxu0 0.0
  %2236 = vmatprep.subr.mxu0 0.0
  %2237 = vmatpush1.msra.mxu0 0.0
  %2238 = vmatprep.subr.mxu0 0.0
  %2239 = vmatpush1.msra.mxu0 0.0
  %2240 = vmatprep.subr.mxu0 0.0
  %2241 = vmatpush1.msra.mxu0 0.0
  %2242 = vmatprep.subr.mxu0 0.0
  %2243 = vmatpush1.msra.mxu0 0.0
  %2244 = vmatprep.subr.mxu0 0.0
  %2245 = vmatpush1.msra.mxu0 0.0
  %2246 = vmatprep.subr.mxu0 0.0
  %2247 = vmatpush1.msra.mxu0 0.0
  %2248 = vmatprep.subr.mxu0 0.0
  %2249 = vmatpush1.msra.mxu0 0.0
  %2250 = vmatprep.subr.mxu0 0.0
  %2251 = vmatpush1.msra.mxu0 %v1079
  %2252 = vmatprep.subr.mxu0 0.0
  %2253 = vmatpush1.msra.mxu0 %v943
  %2254 = vmatprep.subr.mxu0 0.0
  %2255 = vmatpush2.msra.mxu0 0.0
  %2256 = vmatprep.subr.mxu0 0.0
  %2257 = vmatpush2.msra.mxu0 0.0
  %2258 = vmatprep.subr.mxu0 0.0
  %2259 = vmatpush2.msra.mxu0 0.0
  %2260 = vmatprep.subr.mxu0 0.0
  %2261 = vmatpush2.msra.mxu0 0.0
  %2262 = vmatprep.subr.mxu0 0.0
  %2263 = vmatpush2.msra.mxu0 0.0
  %2264 = vmatprep.subr.mxu0 0.0
  %2265 = vmatpush2.msra.mxu0 0.0
  %2266 = vmatprep.subr.mxu0 0.0
  %2267 = vmatpush2.msra.mxu0 0.0
  %2268 = vmatprep.subr.mxu0 0.0
  %2269 = vmatpush2.msra.mxu0 0.0
  %2270 = vmatprep.subr.mxu0 0.0
  %2271 = vmatpush2.msra.mxu0 0.0
  %2272 = vmatprep.subr.mxu0 0.0
  %2273 = vmatpush2.msra.mxu0 0.0
  %2274 = vmatprep.subr.mxu0 0.0
  %2275 = vmatpush2.msra.mxu0 0.0
  %2276 = vmatprep.subr.mxu0 0.0
  %2277 = vmatpush2.msra.mxu0 0.0
  %2278 = vmatprep.subr.mxu0 0.0
  %2279 = vmatpush2.msra.mxu0 0.0
  %2280 = vmatprep.subr.mxu0 0.0
  %2281 = vmatpush2.msra.mxu0 0.0
  %2282 = vmatprep.subr.mxu0 0.0
  %2283 = vmatpush2.msra.mxu0 0.0
  %2284 = vmatprep.subr.mxu0 0.0
  %2285 = vmatpush2.msra.mxu0 0.0
  %2286 = vmatprep.mubr.f32.mxu0 0.0
  %2287 = vmatmul.mubr.f32.gmra.mxu0 %v2217
  %v2288 = vpop.f32.mrf.mxu0
  %v2289 = vadd.f32 0.0, %v2288
  %v2290 = vpop.f32.mrf.mxu0
  %2291 = vmatprep.mubr.f32.mxu0 0.0
  %2292 = vmatmul.mubr.f32.gmra.mxu0 %v2220
  %v2293 = vpop.f32.mrf.mxu0
  %v2294 = vadd.f32 0.0, %v2293
  %v2295 = vpop.f32.mrf.mxu0
  %2296 = vdwg.mxu0
  %v2298 = vsel %vm1084, %v1958, 0
  %v2301 = vsel %vm1084, %v1960, 0
  %2303 = vmatprep.subr.mxu0 0.0
  %2304 = vmatpush1.msra.mxu0 0.0
  %2305 = vmatprep.subr.mxu0 0.0
  %2306 = vmatpush1.msra.mxu0 0.0
  %2307 = vmatprep.subr.mxu0 0.0
  %2308 = vmatpush1.msra.mxu0 0.0
  %2309 = vmatprep.subr.mxu0 0.0
  %2310 = vmatpush1.msra.mxu0 0.0
  %2311 = vmatprep.subr.mxu0 0.0
  %2312 = vmatpush1.msra.mxu0 0.0
  %2313 = vmatprep.subr.mxu0 0.0
  %2314 = vmatpush1.msra.mxu0 0.0
  %2315 = vmatprep.subr.mxu0 0.0
  %2316 = vmatpush1.msra.mxu0 0.0
  %2317 = vmatprep.subr.mxu0 0.0
  %2318 = vmatpush1.msra.mxu0 0.0
  %2319 = vmatprep.subr.mxu0 0.0
  %2320 = vmatpush1.msra.mxu0 0.0
  %2321 = vmatprep.subr.mxu0 0.0
  %2322 = vmatpush1.msra.mxu0 0.0
  %2323 = vmatprep.subr.mxu0 0.0
  %2324 = vmatpush1.msra.mxu0 0.0
  %2325 = vmatprep.subr.mxu0 0.0
  %2326 = vmatpush1.msra.mxu0 0.0
  %2327 = vmatprep.subr.mxu0 0.0
  %2328 = vmatpush1.msra.mxu0 0.0
  %2329 = vmatprep.subr.mxu0 0.0
  %2330 = vmatpush1.msra.mxu0 0.0
  %2331 = vmatprep.subr.mxu0 0.0
  %2332 = vmatpush1.msra.mxu0 %v1080
  %2333 = vmatprep.subr.mxu0 0.0
  %2334 = vmatpush1.msra.mxu0 %v944
  %2335 = vmatprep.subr.mxu0 0.0
  %2336 = vmatpush2.msra.mxu0 0.0
  %2337 = vmatprep.subr.mxu0 0.0
  %2338 = vmatpush2.msra.mxu0 0.0
  %2339 = vmatprep.subr.mxu0 0.0
  %2340 = vmatpush2.msra.mxu0 0.0
  %2341 = vmatprep.subr.mxu0 0.0
  %2342 = vmatpush2.msra.mxu0 0.0
  %2343 = vmatprep.subr.mxu0 0.0
  %2344 = vmatpush2.msra.mxu0 0.0
  %2345 = vmatprep.subr.mxu0 0.0
  %2346 = vmatpush2.msra.mxu0 0.0
  %2347 = vmatprep.subr.mxu0 0.0
  %2348 = vmatpush2.msra.mxu0 0.0
  %2349 = vmatprep.subr.mxu0 0.0
  %2350 = vmatpush2.msra.mxu0 0.0
  %2351 = vmatprep.subr.mxu0 0.0
  %2352 = vmatpush2.msra.mxu0 0.0
  %2353 = vmatprep.subr.mxu0 0.0
  %2354 = vmatpush2.msra.mxu0 0.0
  %2355 = vmatprep.subr.mxu0 0.0
  %2356 = vmatpush2.msra.mxu0 0.0
  %2357 = vmatprep.subr.mxu0 0.0
  %2358 = vmatpush2.msra.mxu0 0.0
  %2359 = vmatprep.subr.mxu0 0.0
  %2360 = vmatpush2.msra.mxu0 0.0
  %2361 = vmatprep.subr.mxu0 0.0
  %2362 = vmatpush2.msra.mxu0 0.0
  %2363 = vmatprep.subr.mxu0 0.0
  %2364 = vmatpush2.msra.mxu0 0.0
  %2365 = vmatprep.subr.mxu0 0.0
  %2366 = vmatpush2.msra.mxu0 0.0
  %2367 = vmatprep.mubr.f32.mxu0 0.0
  %2368 = vmatmul.mubr.f32.gmra.mxu0 %v2298
  %v2369 = vpop.f32.mrf.mxu0
  %v2370 = vadd.f32 0.0, %v2369
  %v2371 = vpop.f32.mrf.mxu0
  %2372 = vmatprep.mubr.f32.mxu0 0.0
  %2373 = vmatmul.mubr.f32.gmra.mxu0 %v2301
  %v2374 = vpop.f32.mrf.mxu0
  %v2375 = vadd.f32 0.0, %v2374
  %v2376 = vpop.f32.mrf.mxu0
  %2377 = vdwg.mxu0
  %v2379 = vsel %vm1084, %v1962, 0
  %v2382 = vsel %vm1084, %v1964, 0
  %2384 = vmatprep.subr.mxu0 0.0
  %2385 = vmatpush1.msra.mxu0 0.0
  %2386 = vmatprep.subr.mxu0 0.0
  %2387 = vmatpush1.msra.mxu0 0.0
  %2388 = vmatprep.subr.mxu0 0.0
  %2389 = vmatpush1.msra.mxu0 0.0
  %2390 = vmatprep.subr.mxu0 0.0
  %2391 = vmatpush1.msra.mxu0 0.0
  %2392 = vmatprep.subr.mxu0 0.0
  %2393 = vmatpush1.msra.mxu0 0.0
  %2394 = vmatprep.subr.mxu0 0.0
  %2395 = vmatpush1.msra.mxu0 0.0
  %2396 = vmatprep.subr.mxu0 0.0
  %2397 = vmatpush1.msra.mxu0 0.0
  %2398 = vmatprep.subr.mxu0 0.0
  %2399 = vmatpush1.msra.mxu0 0.0
  %2400 = vmatprep.subr.mxu0 0.0
  %2401 = vmatpush1.msra.mxu0 0.0
  %2402 = vmatprep.subr.mxu0 0.0
  %2403 = vmatpush1.msra.mxu0 0.0
  %2404 = vmatprep.subr.mxu0 0.0
  %2405 = vmatpush1.msra.mxu0 0.0
  %2406 = vmatprep.subr.mxu0 0.0
  %2407 = vmatpush1.msra.mxu0 0.0
  %2408 = vmatprep.subr.mxu0 0.0
  %2409 = vmatpush1.msra.mxu0 0.0
  %2410 = vmatprep.subr.mxu0 0.0
  %2411 = vmatpush1.msra.mxu0 0.0
  %2412 = vmatprep.subr.mxu0 0.0
  %2413 = vmatpush1.msra.mxu0 %v1081
  %2414 = vmatprep.subr.mxu0 0.0
  %2415 = vmatpush1.msra.mxu0 %v945
  %2416 = vmatprep.subr.mxu0 0.0
  %2417 = vmatpush2.msra.mxu0 0.0
  %2418 = vmatprep.subr.mxu0 0.0
  %2419 = vmatpush2.msra.mxu0 0.0
  %2420 = vmatprep.subr.mxu0 0.0
  %2421 = vmatpush2.msra.mxu0 0.0
  %2422 = vmatprep.subr.mxu0 0.0
  %2423 = vmatpush2.msra.mxu0 0.0
  %2424 = vmatprep.subr.mxu0 0.0
  %2425 = vmatpush2.msra.mxu0 0.0
  %2426 = vmatprep.subr.mxu0 0.0
  %2427 = vmatpush2.msra.mxu0 0.0
  %2428 = vmatprep.subr.mxu0 0.0
  %2429 = vmatpush2.msra.mxu0 0.0
  %2430 = vmatprep.subr.mxu0 0.0
  %2431 = vmatpush2.msra.mxu0 0.0
  %2432 = vmatprep.subr.mxu0 0.0
  %2433 = vmatpush2.msra.mxu0 0.0
  %2434 = vmatprep.subr.mxu0 0.0
  %2435 = vmatpush2.msra.mxu0 0.0
  %2436 = vmatprep.subr.mxu0 0.0
  %2437 = vmatpush2.msra.mxu0 0.0
  %2438 = vmatprep.subr.mxu0 0.0
  %2439 = vmatpush2.msra.mxu0 0.0
  %2440 = vmatprep.subr.mxu0 0.0
  %2441 = vmatpush2.msra.mxu0 0.0
  %2442 = vmatprep.subr.mxu0 0.0
  %2443 = vmatpush2.msra.mxu0 0.0
  %2444 = vmatprep.subr.mxu0 0.0
  %2445 = vmatpush2.msra.mxu0 0.0
  %2446 = vmatprep.subr.mxu0 0.0
  %2447 = vmatpush2.msra.mxu0 0.0
  %2448 = vmatprep.mubr.f32.mxu0 0.0
  %2449 = vmatmul.mubr.f32.gmra.mxu0 %v2379
  %v2450 = vpop.f32.mrf.mxu0
  %v2451 = vadd.f32 0.0, %v2450
  %v2452 = vpop.f32.mrf.mxu0
  %2453 = vmatprep.mubr.f32.mxu0 0.0
  %2454 = vmatmul.mubr.f32.gmra.mxu0 %v2382
  %v2455 = vpop.f32.mrf.mxu0
  %v2456 = vadd.f32 0.0, %v2455
  %v2457 = vpop.f32.mrf.mxu0
  %2458 = vdwg.mxu0
  %v2460 = vsel %vm1084, %v1966, 0
  %v2463 = vsel %vm1084, %v1968, 0
  %2465 = vmatprep.subr.mxu0 0.0
  %2466 = vmatpush1.msra.mxu0 0.0
  %2467 = vmatprep.subr.mxu0 0.0
  %2468 = vmatpush1.msra.mxu0 0.0
  %2469 = vmatprep.subr.mxu0 0.0
  %2470 = vmatpush1.msra.mxu0 0.0
  %2471 = vmatprep.subr.mxu0 0.0
  %2472 = vmatpush1.msra.mxu0 0.0
  %2473 = vmatprep.subr.mxu0 0.0
  %2474 = vmatpush1.msra.mxu0 0.0
  %2475 = vmatprep.subr.mxu0 0.0
  %2476 = vmatpush1.msra.mxu0 0.0
  %2477 = vmatprep.subr.mxu0 0.0
  %2478 = vmatpush1.msra.mxu0 0.0
  %2479 = vmatprep.subr.mxu0 0.0
  %2480 = vmatpush1.msra.mxu0 0.0
  %2481 = vmatprep.subr.mxu0 0.0
  %2482 = vmatpush1.msra.mxu0 0.0
  %2483 = vmatprep.subr.mxu0 0.0
  %2484 = vmatpush1.msra.mxu0 0.0
  %2485 = vmatprep.subr.mxu0 0.0
  %2486 = vmatpush1.msra.mxu0 0.0
  %2487 = vmatprep.subr.mxu0 0.0
  %2488 = vmatpush1.msra.mxu0 0.0
  %2489 = vmatprep.subr.mxu0 0.0
  %2490 = vmatpush1.msra.mxu0 0.0
  %2491 = vmatprep.subr.mxu0 0.0
  %2492 = vmatpush1.msra.mxu0 0.0
  %2493 = vmatprep.subr.mxu0 0.0
  %2494 = vmatpush1.msra.mxu0 %v1082
  %2495 = vmatprep.subr.mxu0 0.0
  %2496 = vmatpush1.msra.mxu0 %v946
  %2497 = vmatprep.subr.mxu0 0.0
  %2498 = vmatpush2.msra.mxu0 0.0
  %2499 = vmatprep.subr.mxu0 0.0
  %2500 = vmatpush2.msra.mxu0 0.0
  %2501 = vmatprep.subr.mxu0 0.0
  %2502 = vmatpush2.msra.mxu0 0.0
  %2503 = vmatprep.subr.mxu0 0.0
  %2504 = vmatpush2.msra.mxu0 0.0
  %2505 = vmatprep.subr.mxu0 0.0
  %2506 = vmatpush2.msra.mxu0 0.0
  %2507 = vmatprep.subr.mxu0 0.0
  %2508 = vmatpush2.msra.mxu0 0.0
  %2509 = vmatprep.subr.mxu0 0.0
  %2510 = vmatpush2.msra.mxu0 0.0
  %2511 = vmatprep.subr.mxu0 0.0
  %2512 = vmatpush2.msra.mxu0 0.0
  %2513 = vmatprep.subr.mxu0 0.0
  %2514 = vmatpush2.msra.mxu0 0.0
  %2515 = vmatprep.subr.mxu0 0.0
  %2516 = vmatpush2.msra.mxu0 0.0
  %2517 = vmatprep.subr.mxu0 0.0
  %2518 = vmatpush2.msra.mxu0 0.0
  %2519 = vmatprep.subr.mxu0 0.0
  %2520 = vmatpush2.msra.mxu0 0.0
  %2521 = vmatprep.subr.mxu0 0.0
  %2522 = vmatpush2.msra.mxu0 0.0
  %2523 = vmatprep.subr.mxu0 0.0
  %2524 = vmatpush2.msra.mxu0 0.0
  %2525 = vmatprep.subr.mxu0 0.0
  %2526 = vmatpush2.msra.mxu0 0.0
  %2527 = vmatprep.subr.mxu0 0.0
  %2528 = vmatpush2.msra.mxu0 0.0
  %2529 = vmatprep.mubr.f32.mxu0 0.0
  %2530 = vmatmul.mubr.f32.gmra.mxu0 %v2460
  %v2531 = vpop.f32.mrf.mxu0
  %v2532 = vadd.f32 0.0, %v2531
  %v2533 = vpop.f32.mrf.mxu0
  %2534 = vmatprep.mubr.f32.mxu0 0.0
  %2535 = vmatmul.mubr.f32.gmra.mxu0 %v2463
  %v2536 = vpop.f32.mrf.mxu0
  %v2537 = vadd.f32 0.0, %v2536
  %v2538 = vpop.f32.mrf.mxu0
  %2539 = vdwg.mxu0
  %v2541 = vsel %vm1084, %v1970, 0
  %v2544 = vsel %vm1084, %v1972, 0
  %2546 = vmatprep.subr.mxu0 0.0
  %2547 = vmatpush1.msra.mxu0 0.0
  %2548 = vmatprep.subr.mxu0 0.0
  %2549 = vmatpush1.msra.mxu0 0.0
  %2550 = vmatprep.subr.mxu0 0.0
  %2551 = vmatpush1.msra.mxu0 0.0
  %2552 = vmatprep.subr.mxu0 0.0
  %2553 = vmatpush1.msra.mxu0 0.0
  %2554 = vmatprep.subr.mxu0 0.0
  %2555 = vmatpush1.msra.mxu0 0.0
  %2556 = vmatprep.subr.mxu0 0.0
  %2557 = vmatpush1.msra.mxu0 0.0
  %2558 = vmatprep.subr.mxu0 0.0
  %2559 = vmatpush1.msra.mxu0 0.0
  %2560 = vmatprep.subr.mxu0 0.0
  %2561 = vmatpush1.msra.mxu0 0.0
  %2562 = vmatprep.subr.mxu0 0.0
  %2563 = vmatpush1.msra.mxu0 0.0
  %2564 = vmatprep.subr.mxu0 0.0
  %2565 = vmatpush1.msra.mxu0 0.0
  %2566 = vmatprep.subr.mxu0 0.0
  %2567 = vmatpush1.msra.mxu0 0.0
  %2568 = vmatprep.subr.mxu0 0.0
  %2569 = vmatpush1.msra.mxu0 0.0
  %2570 = vmatprep.subr.mxu0 0.0
  %2571 = vmatpush1.msra.mxu0 0.0
  %2572 = vmatprep.subr.mxu0 0.0
  %2573 = vmatpush1.msra.mxu0 0.0
  %2574 = vmatprep.subr.mxu0 0.0
  %2575 = vmatpush1.msra.mxu0 %v1083
  %2576 = vmatprep.subr.mxu0 0.0
  %2577 = vmatpush1.msra.mxu0 %v947
  %2578 = vmatprep.subr.mxu0 0.0
  %2579 = vmatpush2.msra.mxu0 0.0
  %2580 = vmatprep.subr.mxu0 0.0
  %2581 = vmatpush2.msra.mxu0 0.0
  %2582 = vmatprep.subr.mxu0 0.0
  %2583 = vmatpush2.msra.mxu0 0.0
  %2584 = vmatprep.subr.mxu0 0.0
  %2585 = vmatpush2.msra.mxu0 0.0
  %2586 = vmatprep.subr.mxu0 0.0
  %2587 = vmatpush2.msra.mxu0 0.0
  %2588 = vmatprep.subr.mxu0 0.0
  %2589 = vmatpush2.msra.mxu0 0.0
  %2590 = vmatprep.subr.mxu0 0.0
  %2591 = vmatpush2.msra.mxu0 0.0
  %2592 = vmatprep.subr.mxu0 0.0
  %2593 = vmatpush2.msra.mxu0 0.0
  %2594 = vmatprep.subr.mxu0 0.0
  %2595 = vmatpush2.msra.mxu0 0.0
  %2596 = vmatprep.subr.mxu0 0.0
  %2597 = vmatpush2.msra.mxu0 0.0
  %2598 = vmatprep.subr.mxu0 0.0
  %2599 = vmatpush2.msra.mxu0 0.0
  %2600 = vmatprep.subr.mxu0 0.0
  %2601 = vmatpush2.msra.mxu0 0.0
  %2602 = vmatprep.subr.mxu0 0.0
  %2603 = vmatpush2.msra.mxu0 0.0
  %2604 = vmatprep.subr.mxu0 0.0
  %2605 = vmatpush2.msra.mxu0 0.0
  %2606 = vmatprep.subr.mxu0 0.0
  %2607 = vmatpush2.msra.mxu0 0.0
  %2608 = vmatprep.subr.mxu0 0.0
  %2609 = vmatpush2.msra.mxu0 0.0
  %2610 = vmatprep.mubr.f32.mxu0 0.0
  %2611 = vmatmul.mubr.f32.gmra.mxu0 %v2541
  %v2612 = vpop.f32.mrf.mxu0
  %v2613 = vadd.f32 0.0, %v2612
  %v2614 = vpop.f32.mrf.mxu0
  %2615 = vmatprep.mubr.f32.mxu0 0.0
  %2616 = vmatmul.mubr.f32.gmra.mxu0 %v2544
  %v2617 = vpop.f32.mrf.mxu0
  %v2618 = vadd.f32 0.0, %v2617
  %v2619 = vpop.f32.mrf.mxu0
  %2620 = vdwg.mxu0
  %v2621 = vcombine.low %v2046, %v2208
  %v2622 = vcombine.high %v2046, %v2208
  %v2624 = vunpack.c.l.s4 1983009808
  %v2625 = vunpack.c.0.s8 %v2624
  %v2626 = vlaneseq
  %v2627 = vshrl.u32 %v2626, 7
  %v2628 = vsub.s32 %v2625, %v2627
  %v2629 = vrot.slane %v2621, %v2628
  %v2631 = vunpack.c.l.s4 1983009808
  %v2632 = vunpack.c.0.s8 %v2631
  %v2633 = vlaneseq
  %v2634 = vshrl.u32 %v2633, 7
  %v2635 = vsub.s32 %v2632, %v2634
  %v2636 = vrot.slane %v2622, %v2635
  %v2637 = vcombine.low %v2127, %v2289
  %v2638 = vcombine.high %v2127, %v2289
  %v2640 = vunpack.c.l.s4 1983009808
  %v2641 = vunpack.c.0.s8 %v2640
  %v2642 = vlaneseq
  %v2643 = vshrl.u32 %v2642, 7
  %v2644 = vsub.s32 %v2641, %v2643
  %v2645 = vrot.slane %v2637, %v2644
  %v2647 = vunpack.c.l.s4 1983009808
  %v2648 = vunpack.c.0.s8 %v2647
  %v2649 = vlaneseq
  %v2650 = vshrl.u32 %v2649, 7
  %v2651 = vsub.s32 %v2648, %v2650
  %v2652 = vrot.slane %v2638, %v2651
  %v2653 = vcombine.low %v2370, %v2532
  %v2654 = vcombine.high %v2370, %v2532
  %v2656 = vunpack.c.l.s4 1983009808
  %v2657 = vunpack.c.0.s8 %v2656
  %v2658 = vlaneseq
  %v2659 = vshrl.u32 %v2658, 7
  %v2660 = vsub.s32 %v2657, %v2659
  %v2661 = vrot.slane %v2653, %v2660
  %v2663 = vunpack.c.l.s4 1983009808
  %v2664 = vunpack.c.0.s8 %v2663
  %v2665 = vlaneseq
  %v2666 = vshrl.u32 %v2665, 7
  %v2667 = vsub.s32 %v2664, %v2666
  %v2668 = vrot.slane %v2654, %v2667
  %v2669 = vcombine.low %v2451, %v2613
  %v2670 = vcombine.high %v2451, %v2613
  %v2672 = vunpack.c.l.s4 1983009808
  %v2673 = vunpack.c.0.s8 %v2672
  %v2674 = vlaneseq
  %v2675 = vshrl.u32 %v2674, 7
  %v2676 = vsub.s32 %v2673, %v2675
  %v2677 = vrot.slane %v2669, %v2676
  %v2679 = vunpack.c.l.s4 1983009808
  %v2680 = vunpack.c.0.s8 %v2679
  %v2681 = vlaneseq
  %v2682 = vshrl.u32 %v2681, 7
  %v2683 = vsub.s32 %v2680, %v2682
  %v2684 = vrot.slane %v2670, %v2683
  %v2685 = vcombine.low %v2629, %v2645
  %v2686 = vcombine.high %v2629, %v2645
  %v2688 = vunpack.c.l.s4 1934713408
  %v2689 = vunpack.c.0.s8 %v2688
  %v2690 = vlaneseq
  %v2691 = vshrl.u32 %v2690, 7
  %v2692 = vsub.s32 %v2689, %v2691
  %v2693 = vrot.slane %v2685, %v2692
  %v2695 = vunpack.c.l.s4 1934713408
  %v2696 = vunpack.c.0.s8 %v2695
  %v2697 = vlaneseq
  %v2698 = vshrl.u32 %v2697, 7
  %v2699 = vsub.s32 %v2696, %v2698
  %v2700 = vrot.slane %v2686, %v2699
  %v2701 = vcombine.low %v2636, %v2652
  %v2702 = vcombine.high %v2636, %v2652
  %v2704 = vunpack.c.l.s4 1934713408
  %v2705 = vunpack.c.0.s8 %v2704
  %v2706 = vlaneseq
  %v2707 = vshrl.u32 %v2706, 7
  %v2708 = vsub.s32 %v2705, %v2707
  %v2709 = vrot.slane %v2701, %v2708
  %v2711 = vunpack.c.l.s4 1934713408
  %v2712 = vunpack.c.0.s8 %v2711
  %v2713 = vlaneseq
  %v2714 = vshrl.u32 %v2713, 7
  %v2715 = vsub.s32 %v2712, %v2714
  %v2716 = vrot.slane %v2702, %v2715
  %v2717 = vcombine.low %v2661, %v2677
  %v2718 = vcombine.high %v2661, %v2677
  %v2720 = vunpack.c.l.s4 1934713408
  %v2721 = vunpack.c.0.s8 %v2720
  %v2722 = vlaneseq
  %v2723 = vshrl.u32 %v2722, 7
  %v2724 = vsub.s32 %v2721, %v2723
  %v2725 = vrot.slane %v2717, %v2724
  %v2727 = vunpack.c.l.s4 1934713408
  %v2728 = vunpack.c.0.s8 %v2727
  %v2729 = vlaneseq
  %v2730 = vshrl.u32 %v2729, 7
  %v2731 = vsub.s32 %v2728, %v2730
  %v2732 = vrot.slane %v2718, %v2731
  %v2733 = vcombine.low %v2668, %v2684
  %v2734 = vcombine.high %v2668, %v2684
  %v2736 = vunpack.c.l.s4 1934713408
  %v2737 = vunpack.c.0.s8 %v2736
  %v2738 = vlaneseq
  %v2739 = vshrl.u32 %v2738, 7
  %v2740 = vsub.s32 %v2737, %v2739
  %v2741 = vrot.slane %v2733, %v2740
  %v2743 = vunpack.c.l.s4 1934713408
  %v2744 = vunpack.c.0.s8 %v2743
  %v2745 = vlaneseq
  %v2746 = vshrl.u32 %v2745, 7
  %v2747 = vsub.s32 %v2744, %v2746
  %v2748 = vrot.slane %v2734, %v2747
  %v2749 = vcombine.low %v2693, %v2725
  %v2750 = vcombine.high %v2693, %v2725
  %v2751 = vcombine.low %v2700, %v2732
  %v2752 = vcombine.high %v2700, %v2732
  %v2753 = vcombine.low %v2709, %v2741
  %v2754 = vcombine.high %v2709, %v2741
  %v2755 = vcombine.low %v2716, %v2748
  %v2756 = vcombine.high %v2716, %v2748
  %v2757 = vcombine.low %v2051, %v2213
  %v2758 = vcombine.high %v2051, %v2213
  %v2760 = vunpack.c.l.s4 1983009808
  %v2761 = vunpack.c.0.s8 %v2760
  %v2762 = vlaneseq
  %v2763 = vshrl.u32 %v2762, 7
  %v2764 = vsub.s32 %v2761, %v2763
  %v2765 = vrot.slane %v2757, %v2764
  %v2767 = vunpack.c.l.s4 1983009808
  %v2768 = vunpack.c.0.s8 %v2767
  %v2769 = vlaneseq
  %v2770 = vshrl.u32 %v2769, 7
  %v2771 = vsub.s32 %v2768, %v2770
  %v2772 = vrot.slane %v2758, %v2771
  %v2773 = vcombine.low %v2132, %v2294
  %v2774 = vcombine.high %v2132, %v2294
  %v2776 = vunpack.c.l.s4 1983009808
  %v2777 = vunpack.c.0.s8 %v2776
  %v2778 = vlaneseq
  %v2779 = vshrl.u32 %v2778, 7
  %v2780 = vsub.s32 %v2777, %v2779
  %v2781 = vrot.slane %v2773, %v2780
  %v2783 = vunpack.c.l.s4 1983009808
  %v2784 = vunpack.c.0.s8 %v2783
  %v2785 = vlaneseq
  %v2786 = vshrl.u32 %v2785, 7
  %v2787 = vsub.s32 %v2784, %v2786
  %v2788 = vrot.slane %v2774, %v2787
  %v2789 = vcombine.low %v2375, %v2537
  %v2790 = vcombine.high %v2375, %v2537
  %v2792 = vunpack.c.l.s4 1983009808
  %v2793 = vunpack.c.0.s8 %v2792
  %v2794 = vlaneseq
  %v2795 = vshrl.u32 %v2794, 7
  %v2796 = vsub.s32 %v2793, %v2795
  %v2797 = vrot.slane %v2789, %v2796
  %v2799 = vunpack.c.l.s4 1983009808
  %v2800 = vunpack.c.0.s8 %v2799
  %v2801 = vlaneseq
  %v2802 = vshrl.u32 %v2801, 7
  %v2803 = vsub.s32 %v2800, %v2802
  %v2804 = vrot.slane %v2790, %v2803
  %v2805 = vcombine.low %v2456, %v2618
  %v2806 = vcombine.high %v2456, %v2618
  %v2808 = vunpack.c.l.s4 1983009808
  %v2809 = vunpack.c.0.s8 %v2808
  %v2810 = vlaneseq
  %v2811 = vshrl.u32 %v2810, 7
  %v2812 = vsub.s32 %v2809, %v2811
  %v2813 = vrot.slane %v2805, %v2812
  %v2815 = vunpack.c.l.s4 1983009808
  %v2816 = vunpack.c.0.s8 %v2815
  %v2817 = vlaneseq
  %v2818 = vshrl.u32 %v2817, 7
  %v2819 = vsub.s32 %v2816, %v2818
  %v2820 = vrot.slane %v2806, %v2819
  %v2821 = vcombine.low %v2765, %v2781
  %v2822 = vcombine.high %v2765, %v2781
  %v2824 = vunpack.c.l.s4 1934713408
  %v2825 = vunpack.c.0.s8 %v2824
  %v2826 = vlaneseq
  %v2827 = vshrl.u32 %v2826, 7
  %v2828 = vsub.s32 %v2825, %v2827
  %v2829 = vrot.slane %v2821, %v2828
  %v2831 = vunpack.c.l.s4 1934713408
  %v2832 = vunpack.c.0.s8 %v2831
  %v2833 = vlaneseq
  %v2834 = vshrl.u32 %v2833, 7
  %v2835 = vsub.s32 %v2832, %v2834
  %v2836 = vrot.slane %v2822, %v2835
  %v2837 = vcombine.low %v2772, %v2788
  %v2838 = vcombine.high %v2772, %v2788
  %v2840 = vunpack.c.l.s4 1934713408
  %v2841 = vunpack.c.0.s8 %v2840
  %v2842 = vlaneseq
  %v2843 = vshrl.u32 %v2842, 7
  %v2844 = vsub.s32 %v2841, %v2843
  %v2845 = vrot.slane %v2837, %v2844
  %v2847 = vunpack.c.l.s4 1934713408
  %v2848 = vunpack.c.0.s8 %v2847
  %v2849 = vlaneseq
  %v2850 = vshrl.u32 %v2849, 7
  %v2851 = vsub.s32 %v2848, %v2850
  %v2852 = vrot.slane %v2838, %v2851
  %v2853 = vcombine.low %v2797, %v2813
  %v2854 = vcombine.high %v2797, %v2813
  %v2856 = vunpack.c.l.s4 1934713408
  %v2857 = vunpack.c.0.s8 %v2856
  %v2858 = vlaneseq
  %v2859 = vshrl.u32 %v2858, 7
  %v2860 = vsub.s32 %v2857, %v2859
  %v2861 = vrot.slane %v2853, %v2860
  %v2863 = vunpack.c.l.s4 1934713408
  %v2864 = vunpack.c.0.s8 %v2863
  %v2865 = vlaneseq
  %v2866 = vshrl.u32 %v2865, 7
  %v2867 = vsub.s32 %v2864, %v2866
  %v2868 = vrot.slane %v2854, %v2867
  %v2869 = vcombine.low %v2804, %v2820
  %v2870 = vcombine.high %v2804, %v2820
  %v2872 = vunpack.c.l.s4 1934713408
  %v2873 = vunpack.c.0.s8 %v2872
  %v2874 = vlaneseq
  %v2875 = vshrl.u32 %v2874, 7
  %v2876 = vsub.s32 %v2873, %v2875
  %v2877 = vrot.slane %v2869, %v2876
  %v2879 = vunpack.c.l.s4 1934713408
  %v2880 = vunpack.c.0.s8 %v2879
  %v2881 = vlaneseq
  %v2882 = vshrl.u32 %v2881, 7
  %v2883 = vsub.s32 %v2880, %v2882
  %v2884 = vrot.slane %v2870, %v2883
  %v2885 = vcombine.low %v2829, %v2861
  %v2886 = vcombine.high %v2829, %v2861
  %v2887 = vcombine.low %v2836, %v2868
  %v2888 = vcombine.high %v2836, %v2868
  %v2889 = vcombine.low %v2845, %v2877
  %v2890 = vcombine.high %v2845, %v2877
  %v2891 = vcombine.low %v2852, %v2884
  %v2892 = vcombine.high %v2852, %v2884
  %2894 = vrot.lane.b32.xlu0 %v2750, 16
  %v2895 = vpop.permute.xlu0 %2894
  %2898 = vrot.lane.b32.xlu0 %v2751, 32
  %v2899 = vpop.permute.xlu0 %2898
  %2902 = vrot.lane.b32.xlu0 %v2752, 48
  %v2903 = vpop.permute.xlu0 %2902
  %2906 = vrot.lane.b32.xlu0 %v2753, 64
  %v2907 = vpop.permute.xlu0 %2906
  %2910 = vrot.lane.b32.xlu0 %v2754, 80
  %v2911 = vpop.permute.xlu0 %2910
  %2914 = vrot.lane.b32.xlu0 %v2755, 96
  %v2915 = vpop.permute.xlu0 %2914
  %2918 = vrot.lane.b32.xlu0 %v2756, 112
  %v2919 = vpop.permute.xlu0 %2918
  %2922 = vrot.lane.b32.xlu0 %v2886, 16
  %v2923 = vpop.permute.xlu0 %2922
  %2926 = vrot.lane.b32.xlu0 %v2887, 32
  %v2927 = vpop.permute.xlu0 %2926
  %2930 = vrot.lane.b32.xlu0 %v2888, 48
  %v2931 = vpop.permute.xlu0 %2930
  %2934 = vrot.lane.b32.xlu0 %v2889, 64
  %v2935 = vpop.permute.xlu0 %2934
  %2938 = vrot.lane.b32.xlu0 %v2890, 80
  %v2939 = vpop.permute.xlu0 %2938
  %2942 = vrot.lane.b32.xlu0 %v2891, 96
  %v2943 = vpop.permute.xlu0 %2942
  %2946 = vrot.lane.b32.xlu0 %v2892, 112
  %v2947 = vpop.permute.xlu0 %2946
  %v2949 = vsel %vm1084, %v2749, %v2895
  %vm2950 = vcmask 261120
  %v2951 = vsel %vm2950, %v2949, %v2899
  %vm2952 = vcmask 392192
  %v2953 = vsel %vm2952, %v2951, %v2903
  %vm2954 = vcmask 523264
  %v2955 = vsel %vm2954, %v2953, %v2907
  %vm2956 = vcmask 654336
  %v2957 = vsel %vm2956, %v2955, %v2911
  %vm2958 = vcmask 785408
  %v2959 = vsel %vm2958, %v2957, %v2915
  %vm2960 = vcmask 916480
  %v2961 = vsel %vm2960, %v2959, %v2919
  %v2962 = vsel %vm1084, %v2885, %v2923
  %v2963 = vsel %vm2950, %v2962, %v2927
  %v2964 = vsel %vm2952, %v2963, %v2931
  %v2965 = vsel %vm2954, %v2964, %v2935
  %v2966 = vsel %vm2956, %v2965, %v2939
  %v2967 = vsel %vm2958, %v2966, %v2943
  %v2968 = vsel %vm2960, %v2967, %v2947
  %v2969 = vld [vmem:[%s3] sm:$0xff]
  %v2970 = vld [vmem:[%s4] sm:$0xff]
  %2972 = vset.pattern.permute.xlu0 0
  %2973 = vperm.xlu0 %2972, %v2970
  %v2974 = vpop.permute.xlu0 %2973
  %v2977 = vsel %vm43, %v2969, 0
  %2979 = vmatprep.subr.mxu0 0.0
  %2980 = vmatpush1.msra.mxu0 0.0
  %2981 = vmatprep.subr.mxu0 0.0
  %2982 = vmatpush1.msra.mxu0 0.0
  %2983 = vmatprep.subr.mxu0 0.0
  %2984 = vmatpush1.msra.mxu0 0.0
  %2985 = vmatprep.subr.mxu0 0.0
  %2986 = vmatpush1.msra.mxu0 0.0
  %2987 = vmatprep.subr.mxu0 0.0
  %2988 = vmatpush1.msra.mxu0 0.0
  %2989 = vmatprep.subr.mxu0 0.0
  %2990 = vmatpush1.msra.mxu0 0.0
  %2991 = vmatprep.subr.mxu0 0.0
  %2992 = vmatpush1.msra.mxu0 0.0
  %2993 = vmatprep.subr.mxu0 0.0
  %2994 = vmatpush1.msra.mxu0 0.0
  %2995 = vmatprep.subr.mxu0 0.0
  %2996 = vmatpush1.msra.mxu0 0.0
  %2997 = vmatprep.subr.mxu0 0.0
  %2998 = vmatpush1.msra.mxu0 0.0
  %2999 = vmatprep.subr.mxu0 0.0
  %3000 = vmatpush1.msra.mxu0 0.0
  %3001 = vmatprep.subr.mxu0 0.0
  %3002 = vmatpush1.msra.mxu0 0.0
  %3003 = vmatprep.subr.mxu0 0.0
  %3004 = vmatpush1.msra.mxu0 0.0
  %3005 = vmatprep.subr.mxu0 0.0
  %3006 = vmatpush1.msra.mxu0 0.0
  %3007 = vmatprep.subr.mxu0 0.0
  %3008 = vmatpush1.msra.mxu0 0.0
  %3009 = vmatprep.subr.mxu0 %v2968
  %3010 = vmatpush1.msra.mxu0 %v2961
  %3011 = vmatprep.subr.mxu0 0.0
  %3012 = vmatpush2.msra.mxu0 0.0
  %3013 = vmatprep.subr.mxu0 0.0
  %3014 = vmatpush2.msra.mxu0 0.0
  %3015 = vmatprep.subr.mxu0 0.0
  %3016 = vmatpush2.msra.mxu0 0.0
  %3017 = vmatprep.subr.mxu0 0.0
  %3018 = vmatpush2.msra.mxu0 0.0
  %3019 = vmatprep.subr.mxu0 0.0
  %3020 = vmatpush2.msra.mxu0 0.0
  %3021 = vmatprep.subr.mxu0 0.0
  %3022 = vmatpush2.msra.mxu0 0.0
  %3023 = vmatprep.subr.mxu0 0.0
  %3024 = vmatpush2.msra.mxu0 0.0
  %3025 = vmatprep.subr.mxu0 0.0
  %3026 = vmatpush2.msra.mxu0 0.0
  %3027 = vmatprep.subr.mxu0 0.0
  %3028 = vmatpush2.msra.mxu0 0.0
  %3029 = vmatprep.subr.mxu0 0.0
  %3030 = vmatpush2.msra.mxu0 0.0
  %3031 = vmatprep.subr.mxu0 0.0
  %3032 = vmatpush2.msra.mxu0 0.0
  %3033 = vmatprep.subr.mxu0 0.0
  %3034 = vmatpush2.msra.mxu0 0.0
  %3035 = vmatprep.subr.mxu0 0.0
  %3036 = vmatpush2.msra.mxu0 0.0
  %3037 = vmatprep.subr.mxu0 0.0
  %3038 = vmatpush2.msra.mxu0 0.0
  %3039 = vmatprep.subr.mxu0 0.0
  %3040 = vmatpush2.msra.mxu0 0.0
  %3041 = vmatprep.subr.mxu0 0.0
  %3042 = vmatpush2.msra.mxu0 0.0
  %3043 = vmatprep.mubr.f32.mxu0 0.0
  %3044 = vmatmul.mubr.f32.gmra.mxu0 %v2977
  %v3045 = vpop.f32.mrf.mxu0
  %v3046 = vadd.f32 %v2974, %v3045
  %v3047 = vpop.f32.mrf.mxu0
  %v3048 = vadd.f32 %v2974, %v3047
  %3049 = vdwg.mxu0
  %v3050 = vadd.f32 %v3046, %v20
  %v3051 = vadd.f32 %v3048, %v21
  %3052 = vst [vmem:[%s5] sm:$0xff] %v3050
  %3053 = vst [vmem:[%s5 + $0x8] sm:$0xff] %v3051
  // Predicated region
  $region22: #{self_attention_block.1} parent=0 // pred_check
    _
  $region23: #{self_attention_block.1} parent=0 // pred_check_branch
    %3055 = sbr.rel (0) target = $region25
  $region24: #{self_attention_block.1} parent=0 // pred_region
    _
  $region25: #{self_attention_block.1} parent=0 // pred_fallthru
    _
  // Predicated region
  $region26: #{self_attention_block.1} parent=0 // pred_check
    _
  $region27: #{self_attention_block.1} parent=0 // pred_check_branch
    %3057 = sbr.rel (0) target = $region29
  $region28: #{self_attention_block.1} parent=0 // pred_region
    _
  $region29: #{self_attention_block.1} parent=0 // pred_fallthru
    _

</llo_original>
